<compile_context>
chip_gen: v6e
topology: v6e:2x2x1
jax: 0.10.0
libtpu: 0.0.40
codegen_flags: <defaults>
</compile_context>

<pallas_src>
import jax
import jax.numpy as jnp
from jax import lax
from jax.experimental import pallas as pl
from jax.experimental.pallas import tpu as pltpu


# ---------------------------------------------------------------------------
# Kernel 1: GCN conv stack  (A_hat, X -> node embeddings h)
# ---------------------------------------------------------------------------

def gcn_conv_kernel(a_ref, x_ref, wc1_ref, bc1_ref, wc2_ref, bc2_ref, h_ref):
    a = a_ref[...]                                                     # bf16 [N, N]
    h = jnp.dot(x_ref[...], wc1_ref[...],
                preferred_element_type=jnp.float32)                    # X @ W1
    h = jnp.dot(a, h.astype(jnp.bfloat16),
                preferred_element_type=jnp.float32)                    # A_hat @ .
    h = jnp.maximum(h + bc1_ref[...], 0.0).astype(jnp.bfloat16)        # +b, relu (f32)

    h = jnp.dot(h, wc2_ref[...], preferred_element_type=jnp.float32)   # H @ W2
    h = jnp.dot(a, h.astype(jnp.bfloat16),
                preferred_element_type=jnp.float32)                    # A_hat @ .
    h_ref[...] = jnp.maximum(h + bc2_ref[...], 0.0).astype(jnp.bfloat16)


# ---------------------------------------------------------------------------
# Kernel 2: edge head (gather pairs from h -> lin1 -> relu -> lin2 -> log_softmax)
# ---------------------------------------------------------------------------

def edge_head_kernel(src_ref, dst_ref, h_ref, wl1a_ref, wl1b_ref, bl1_ref,
                     wl2_ref, bl2_ref, o_ref):
    n_pad = h_ref.shape[0]
    te = src_ref.shape[0]

    # edge-pair gather as one-hot selection matmuls (MXU, no dynamic gather)
    node_iota = lax.broadcasted_iota(jnp.int32, (te, n_pad), 1)
    sel_src = jnp.where(src_ref[...] == node_iota, 1.0, 0.0).astype(jnp.bfloat16)
    sel_dst = jnp.where(dst_ref[...] == node_iota, 1.0, 0.0).astype(jnp.bfloat16)

    h = h_ref[...]
    x1 = jnp.dot(sel_src, h, preferred_element_type=jnp.float32)       # [TE, H]
    x2 = jnp.dot(sel_dst, h, preferred_element_type=jnp.float32)

    # lin1 on [x1 | x2] concat == x1 @ W1_top + x2 @ W1_bot  (concat eliminated)
    hp = (jnp.dot(x1.astype(jnp.bfloat16), wl1a_ref[...],
                  preferred_element_type=jnp.float32)
          + jnp.dot(x2.astype(jnp.bfloat16), wl1b_ref[...],
                    preferred_element_type=jnp.float32)
          + bl1_ref[...])
    hp = jnp.maximum(hp, 0.0).astype(jnp.bfloat16)

    # lin2 + log_softmax (f32 epilogue; padded class lanes carry -1e9 bias)
    logits = jnp.dot(hp, wl2_ref[...], preferred_element_type=jnp.float32) + bl2_ref[...]
    m = jnp.max(logits, axis=1, keepdims=True)
    lse = m + jnp.log(jnp.sum(jnp.exp(logits - m), axis=1, keepdims=True))
    o_ref[...] = logits - lse


# ---------------------------------------------------------------------------
# Helpers: padding, GCN normalization, parameter init
# ---------------------------------------------------------------------------

def _round_up(v, m):
    return (v + m - 1) // m * m


def _pad2(a, rows, cols):
    return jnp.pad(a, ((0, rows - a.shape[0]), (0, cols - a.shape[1])))


def build_norm_adj(edge_index, num_nodes):
    """Dense A_hat = D^{-1/2} (A + remaining self loops) D^{-1/2} (PyG gcn_norm).

    Duplicate edges (incl. duplicate self loops) are scatter-added and kept; a
    weight-1 self loop is added only for nodes that have none, matching
    add_remaining_self_loops.
    """
    src, dst = edge_index[0], edge_index[1]
    adj = jnp.zeros((num_nodes, num_nodes), jnp.float32)
    adj = adj.at[dst, src].add(1.0)                       # message src -> dst
    has_self_loop = jnp.diag(adj) > 0
    adj = adj + jnp.diag(jnp.where(has_self_loop, 0.0, 1.0))
    deg = jnp.sum(adj, axis=1)                            # in-degree at dst
    d_inv_sqrt = jnp.where(deg > 0, lax.rsqrt(jnp.maximum(deg, 1e-12)), 0.0)
    return d_inv_sqrt[:, None] * adj * d_inv_sqrt[None, :]


def init_params(key, num_node_features, num_classes, hidden=64):
    ks = jax.random.split(key, 6)

    def glorot(k, shape):
        fan_in, fan_out = shape
        scale = jnp.sqrt(6.0 / (fan_in + fan_out))
        return jax.random.uniform(k, shape, jnp.float32, -scale, scale)

    def linear_init(kw, kb, fan_in, fan_out):
        # PyTorch nn.Linear: weight & bias ~ U(-1/sqrt(fan_in), 1/sqrt(fan_in))
        bound = 1.0 / jnp.sqrt(jnp.float32(fan_in))
        w = jax.random.uniform(kw, (fan_in, fan_out), jnp.float32, -bound, bound)
        b = jax.random.uniform(kb, (1, fan_out), jnp.float32, -bound, bound)
        return w, b

    lin1_w, lin1_b = linear_init(ks[2], ks[3], 2 * hidden, hidden)
    lin2_w, lin2_b = linear_init(ks[4], ks[5], hidden, num_classes)

    return {
        "conv1_w": glorot(ks[0], (num_node_features, hidden)),
        "conv1_b": jnp.zeros((1, hidden), jnp.float32),
        "conv2_w": glorot(ks[1], (hidden, hidden)),
        "conv2_b": jnp.zeros((1, hidden), jnp.float32),
        "lin1_w": lin1_w, "lin1_b": lin1_b,
        "lin2_w": lin2_w, "lin2_b": lin2_b,
    }


# ---------------------------------------------------------------------------
# pallas_call builders
# ---------------------------------------------------------------------------

def _whole(shape, single_buffer):
    """Grid-invariant whole-array block. Single-buffered when supported."""
    if single_buffer:
        return pl.BlockSpec(shape, lambda i: (0, 0), pipeline_mode=pl.Buffered(1))
    return pl.BlockSpec(shape, lambda i: (0, 0))


def _run_conv_stack(a_hat, x_p, wc1, bc1, wc2, bc2, single_buffer):
    n_pad = a_hat.shape[0]
    f_pad = x_p.shape[1]
    h_pad = wc1.shape[1]
    inputs = (a_hat, x_p, wc1, bc1, wc2, bc2)
    flops = (2 * n_pad * f_pad * h_pad + 2 * n_pad * h_pad * h_pad
             + 4 * n_pad * n_pad * h_pad)
    bytes_accessed = int(sum(v.size * v.dtype.itemsize for v in inputs)
                         + n_pad * h_pad * 2)
    return pl.pallas_call(
        gcn_conv_kernel,
        out_shape=jax.ShapeDtypeStruct((n_pad, h_pad), jnp.bfloat16),
        grid_spec=pltpu.PrefetchScalarGridSpec(
            num_scalar_prefetch=0,
            grid=(1,),
            in_specs=[_whole(v.shape, single_buffer) for v in inputs],
            out_specs=pl.BlockSpec((n_pad, h_pad), lambda i: (0, 0)),
        ),
        compiler_params=pltpu.CompilerParams(
            dimension_semantics=("arbitrary",),
            # TODO(synk): row-tile A_hat over an extra grid axis for large N so the
            #             working set fits v7x's 64 MiB VMEM.
            vmem_limit_bytes=32 * 1024 * 1024,
        ),
        cost_estimate=pl.CostEstimate(flops=int(flops), transcendentals=0,
                                      bytes_accessed=bytes_accessed),
    )(*inputs)


def _run_edge_head(src, dst, h, wl1a, wl1b, bl1, wl2, bl2, te, single_buffer):
    e_pad = src.shape[0]
    n_pad, h_pad = h.shape
    c_pad = wl2.shape[1]
    inputs = (src, dst, h, wl1a, wl1b, bl1, wl2, bl2)
    flops = (4 * e_pad * n_pad * h_pad        # one-hot gather matmuls
             + 4 * e_pad * h_pad * h_pad      # lin1 (split weights)
             + 2 * e_pad * h_pad * c_pad)     # lin2
    transcendentals = e_pad * c_pad + e_pad
    bytes_accessed = int(sum(v.size * v.dtype.itemsize for v in inputs)
                         + e_pad * c_pad * 4)
    return pl.pallas_call(
        edge_head_kernel,
        out_shape=jax.ShapeDtypeStruct((e_pad, c_pad), jnp.float32),
        grid_spec=pltpu.PrefetchScalarGridSpec(
            num_scalar_prefetch=0,
            grid=(e_pad // te,),
            in_specs=[
                pl.BlockSpec((te, 1), lambda i: (i, 0)),        # edge src (tiled)
                pl.BlockSpec((te, 1), lambda i: (i, 0)),        # edge dst (tiled)
                _whole(h.shape, single_buffer),                 # node embeddings
                _whole(wl1a.shape, single_buffer),
                _whole(wl1b.shape, single_buffer),
                _whole(bl1.shape, single_buffer),
                _whole(wl2.shape, single_buffer),
                _whole(bl2.shape, single_buffer),
            ],
            out_specs=pl.BlockSpec((te, c_pad), lambda i: (i, 0)),
        ),
        compiler_params=pltpu.CompilerParams(
            # edge tiles are fully independent -> megacore-shardable on v7x
            dimension_semantics=("parallel",),
            vmem_limit_bytes=32 * 1024 * 1024,
        ),
        cost_estimate=pl.CostEstimate(flops=int(flops),
                                      transcendentals=int(transcendentals),
                                      bytes_accessed=bytes_accessed),
    )(*inputs)


# ---------------------------------------------------------------------------
# Full forward
# ---------------------------------------------------------------------------

def net_forward(params, x, edge_index, hidden=64, edge_tile=256):
    n, f = x.shape
    e = edge_index.shape[1]
    c = params["lin2_w"].shape[1]

    te = edge_tile                                   # 256: fills v6e/v7x 256-wide MXU,
    n_pad = _round_up(max(n, 8), 128)                #      still a 128-multiple for v5e
    f_pad = _round_up(f, 128)
    h_pad = _round_up(hidden, 128)
    c_pad = _round_up(c, 128)
    e_pad = _round_up(max(e, 1), te)

    # A_hat in bf16: ~3 decimal digits on the norm weights — fine for GCN accuracy,
    # but do not expect 1e-5 agreement with an f32 reference.
    a_hat = _pad2(build_norm_adj(edge_index, n), n_pad, n_pad).astype(jnp.bfloat16)
    x_p = _pad2(x, n_pad, f_pad).astype(jnp.bfloat16)

    wc1 = _pad2(params["conv1_w"], f_pad, h_pad).astype(jnp.bfloat16)
    bc1 = _pad2(params["conv1_b"], 1, h_pad)
    wc2 = _pad2(params["conv2_w"], h_pad, h_pad).astype(jnp.bfloat16)
    bc2 = _pad2(params["conv2_b"], 1, h_pad)

    wl1 = params["lin1_w"]
    wl1a = _pad2(wl1[:hidden], h_pad, h_pad).astype(jnp.bfloat16)   # acts on x1 (src)
    wl1b = _pad2(wl1[hidden:], h_pad, h_pad).astype(jnp.bfloat16)   # acts on x2 (dst)
    bl1 = _pad2(params["lin1_b"], 1, h_pad)
    wl2 = _pad2(params["lin2_w"], h_pad, c_pad).astype(jnp.bfloat16)
    # padded class lanes get a very negative f32 bias so they vanish in log-softmax
    bl2 = jnp.full((1, c_pad), -1e9, jnp.float32).at[:, :c].set(params["lin2_b"])

    src = jnp.zeros((e_pad, 1), jnp.int32).at[:e, 0].set(edge_index[0])
    dst = jnp.zeros((e_pad, 1), jnp.int32).at[:e, 0].set(edge_index[1])

    last_err = None
    for single_buffer in (True, False):
        try:
            h = _run_conv_stack(a_hat, x_p, wc1, bc1, wc2, bc2, single_buffer)
            out = _run_edge_head(src, dst, h, wl1a, wl1b, bl1, wl2, bl2,
                                 te, single_buffer)
            return out[:e, :c]
        except Exception as err:   # pl.Buffered(1) unsupported -> default buffering
            last_err = err
    raise last_err


def net_forward_ref(params, x, edge_index):
    """Pure-JAX f32 reference of the PyTorch forward (for a tolerance check)."""
    a = build_norm_adj(edge_index, x.shape[0])
    h = jnp.maximum(a @ (x @ params["conv1_w"]) + params["conv1_b"], 0.0)
    h = jnp.maximum(a @ (h @ params["conv2_w"]) + params["conv2_b"], 0.0)
    x1 = h[edge_index[0]]
    x2 = h[edge_index[1]]
    xp = jnp.concatenate([x1, x2], axis=1)
    xp = jnp.maximum(xp @ params["lin1_w"] + params["lin1_b"], 0.0)
    logits = xp @ params["lin2_w"] + params["lin2_b"]
    return jax.nn.log_softmax(logits, axis=1)


# ---------------------------------------------------------------------------
if __name__ == "__main__":
    key = jax.random.PRNGKey(0)
    k_x, k_e, k_p = jax.random.split(key, 3)

    num_nodes = 16
    num_node_features = 8
    num_classes = 4
    num_edges = 8

    x = jax.random.normal(k_x, (num_nodes, num_node_features), jnp.float32)
    edge_index = jax.random.randint(k_e, (2, num_edges), 0, num_nodes, jnp.int32)

    params = init_params(k_p, num_node_features, num_classes)

    out = net_forward(params, x, edge_index)
    jax.block_until_ready(out)

    assert out.shape == (num_edges, num_classes)
    # log-softmax rows must sum (in prob space) to ~1
    assert jnp.allclose(jnp.sum(jnp.exp(out), axis=1), 1.0, atol=1e-4)
    # agree with a pure-JAX f32 reference (loose tol: bf16 matmul operands / A_hat)
    ref = net_forward_ref(params, x, edge_index)
    assert float(jnp.max(jnp.abs(out - ref))) < 1e-1

    print("KERNEL_OK")
</pallas_src>

<mosaic_0001>
module attributes {stable_mosaic.version = 11 : i64} {
  func.func @gcn_conv_kernel(%arg0: i32, %arg1: memref<128x128xbf16, #tpu.memory_space<vmem>>, %arg2: memref<128x128xbf16, #tpu.memory_space<vmem>>, %arg3: memref<128x128xbf16, #tpu.memory_space<vmem>>, %arg4: memref<1x128xf32, #tpu.memory_space<vmem>>, %arg5: memref<128x128xbf16, #tpu.memory_space<vmem>>, %arg6: memref<1x128xf32, #tpu.memory_space<vmem>>, %arg7: memref<128x128xbf16, #tpu.memory_space<vmem>>) attributes {dimension_semantics = [#tpu.dimension_semantics<arbitrary>], iteration_bounds = array<i64: 1>, scalar_prefetch = 0 : i64, scratch_operands = 0 : i64, tpu.core_type = #tpu.core_type<tc>, window_params = [{pipeline_mode = #tpu.pipeline_mode<synchronous>, transform_indices = @transform_0, window_bounds = array<i64: 128, 128>}, {pipeline_mode = #tpu.pipeline_mode<synchronous>, transform_indices = @transform_1, window_bounds = array<i64: 128, 128>}, {pipeline_mode = #tpu.pipeline_mode<synchronous>, transform_indices = @transform_2, window_bounds = array<i64: 128, 128>}, {pipeline_mode = #tpu.pipeline_mode<synchronous>, transform_indices = @transform_3, window_bounds = array<i64: 1, 128>}, {pipeline_mode = #tpu.pipeline_mode<synchronous>, transform_indices = @transform_4, window_bounds = array<i64: 128, 128>}, {pipeline_mode = #tpu.pipeline_mode<synchronous>, transform_indices = @transform_5, window_bounds = array<i64: 1, 128>}, {pipeline_mode = #tpu.pipeline_mode<synchronous>, transform_indices = @transform_6, window_bounds = array<i64: 128, 128>}]} {
    %c0 = arith.constant 0 : index
    %c0_0 = arith.constant 0 : index
    %0 = vector.load %arg1[%c0, %c0_0] : memref<128x128xbf16, #tpu.memory_space<vmem>>, vector<128x128xbf16>
    %c0_1 = arith.constant 0 : index
    %c0_2 = arith.constant 0 : index
    %1 = vector.load %arg2[%c0_1, %c0_2] : memref<128x128xbf16, #tpu.memory_space<vmem>>, vector<128x128xbf16>
    %c0_3 = arith.constant 0 : index
    %c0_4 = arith.constant 0 : index
    %2 = vector.load %arg3[%c0_3, %c0_4] : memref<128x128xbf16, #tpu.memory_space<vmem>>, vector<128x128xbf16>
    %cst = arith.constant dense<0.000000e+00> : vector<128x128xf32>
    %3 = tpu.matmul %1, %2, %cst {dimension_numbers = #tpu.dot_dimension_numbers<[1], [0], [0], [1], [0, 0, 1, 1], [], []>} : vector<128x128xbf16>, vector<128x128xbf16>, vector<128x128xf32> -> vector<128x128xf32>
    %4 = arith.truncf %3 : vector<128x128xf32> to vector<128x128xbf16>
    %cst_5 = arith.constant dense<0.000000e+00> : vector<128x128xf32>
    %5 = tpu.matmul %0, %4, %cst_5 {dimension_numbers = #tpu.dot_dimension_numbers<[1], [0], [0], [1], [0, 0, 1, 1], [], []>} : vector<128x128xbf16>, vector<128x128xbf16>, vector<128x128xf32> -> vector<128x128xf32>
    %c0_6 = arith.constant 0 : index
    %c0_7 = arith.constant 0 : index
    %6 = vector.load %arg4[%c0_6, %c0_7] : memref<1x128xf32, #tpu.memory_space<vmem>>, vector<1x128xf32>
    %7 = vector.broadcast %6 : vector<1x128xf32> to vector<128x128xf32>
    %8 = arith.addf %5, %7 : vector<128x128xf32>
    %cst_8 = arith.constant 0.000000e+00 : f32
    %9 = vector.broadcast %cst_8 : f32 to vector<128x128xf32>
    %10 = arith.maximumf %8, %9 : vector<128x128xf32>
    %11 = arith.truncf %10 : vector<128x128xf32> to vector<128x128xbf16>
    %c0_9 = arith.constant 0 : index
    %c0_10 = arith.constant 0 : index
    %12 = vector.load %arg5[%c0_9, %c0_10] : memref<128x128xbf16, #tpu.memory_space<vmem>>, vector<128x128xbf16>
    %cst_11 = arith.constant dense<0.000000e+00> : vector<128x128xf32>
    %13 = tpu.matmul %11, %12, %cst_11 {dimension_numbers = #tpu.dot_dimension_numbers<[1], [0], [0], [1], [0, 0, 1, 1], [], []>} : vector<128x128xbf16>, vector<128x128xbf16>, vector<128x128xf32> -> vector<128x128xf32>
    %14 = arith.truncf %13 : vector<128x128xf32> to vector<128x128xbf16>
    %cst_12 = arith.constant dense<0.000000e+00> : vector<128x128xf32>
    %15 = tpu.matmul %0, %14, %cst_12 {dimension_numbers = #tpu.dot_dimension_numbers<[1], [0], [0], [1], [0, 0, 1, 1], [], []>} : vector<128x128xbf16>, vector<128x128xbf16>, vector<128x128xf32> -> vector<128x128xf32>
    %c0_13 = arith.constant 0 : index
    %c0_14 = arith.constant 0 : index
    %16 = vector.load %arg6[%c0_13, %c0_14] : memref<1x128xf32, #tpu.memory_space<vmem>>, vector<1x128xf32>
    %17 = vector.broadcast %16 : vector<1x128xf32> to vector<128x128xf32>
    %18 = arith.addf %15, %17 : vector<128x128xf32>
    %cst_15 = arith.constant 0.000000e+00 : f32
    %19 = vector.broadcast %cst_15 : f32 to vector<128x128xf32>
    %20 = arith.maximumf %18, %19 : vector<128x128xf32>
    %21 = arith.truncf %20 : vector<128x128xf32> to vector<128x128xbf16>
    %c0_16 = arith.constant 0 : index
    %c0_17 = arith.constant 0 : index
    %22 = vector.load %arg7[%c0_16, %c0_17] : memref<128x128xbf16, #tpu.memory_space<vmem>>, vector<128x128xbf16>
    tpu.vector_store %arg7[%c0_16, %c0_17], %21 {strides = array<i32>} : memref<128x128xbf16, #tpu.memory_space<vmem>>, vector<128x128xbf16>,
    return
  }
  func.func @transform_0(%arg0: i32) -> (i32, i32) {
    %c0_i32 = arith.constant 0 : i32
    %c0_i32_0 = arith.constant 0 : i32
    %c0_i32_1 = arith.constant 0 : i32
    return %c0_i32, %c0_i32_0 : i32, i32
  }
  func.func @transform_1(%arg0: i32) -> (i32, i32) {
    %c0_i32 = arith.constant 0 : i32
    %c0_i32_0 = arith.constant 0 : i32
    %c0_i32_1 = arith.constant 0 : i32
    return %c0_i32, %c0_i32_0 : i32, i32
  }
  func.func @transform_2(%arg0: i32) -> (i32, i32) {
    %c0_i32 = arith.constant 0 : i32
    %c0_i32_0 = arith.constant 0 : i32
    %c0_i32_1 = arith.constant 0 : i32
    return %c0_i32, %c0_i32_0 : i32, i32
  }
  func.func @transform_3(%arg0: i32) -> (i32, i32) {
    %c0_i32 = arith.constant 0 : i32
    %c0_i32_0 = arith.constant 0 : i32
    %c0_i32_1 = arith.constant 0 : i32
    return %c0_i32, %c0_i32_0 : i32, i32
  }
  func.func @transform_4(%arg0: i32) -> (i32, i32) {
    %c0_i32 = arith.constant 0 : i32
    %c0_i32_0 = arith.constant 0 : i32
    %c0_i32_1 = arith.constant 0 : i32
    return %c0_i32, %c0_i32_0 : i32, i32
  }
  func.func @transform_5(%arg0: i32) -> (i32, i32) {
    %c0_i32 = arith.constant 0 : i32
    %c0_i32_0 = arith.constant 0 : i32
    %c0_i32_1 = arith.constant 0 : i32
    return %c0_i32, %c0_i32_0 : i32, i32
  }
  func.func @transform_6(%arg0: i32) -> (i32, i32) {
    %c0_i32 = arith.constant 0 : i32
    %c0_i32_0 = arith.constant 0 : i32
    %c0_i32_1 = arith.constant 0 : i32
    return %c0_i32, %c0_i32_0 : i32, i32
  }
}

module attributes {stable_mosaic.version = 11 : i64} {
  func.func @gcn_conv_kernel(%arg0: i32, %arg1: memref<128x128xbf16, #tpu.memory_space<vmem>>, %arg2: memref<128x128xbf16, #tpu.memory_space<vmem>>, %arg3: memref<128x128xbf16, #tpu.memory_space<vmem>>, %arg4: memref<1x128xf32, #tpu.memory_space<vmem>>, %arg5: memref<128x128xbf16, #tpu.memory_space<vmem>>, %arg6: memref<1x128xf32, #tpu.memory_space<vmem>>, %arg7: memref<128x128xbf16, #tpu.memory_space<vmem>>) attributes {dimension_semantics = [#tpu.dimension_semantics<arbitrary>], iteration_bounds = array<i64: 1>, scalar_prefetch = 0 : i64, scratch_operands = 0 : i64, tpu.core_type = #tpu.core_type<tc>, window_params = [{pipeline_mode = #tpu.pipeline_mode<synchronous>, transform_indices = @transform_0, window_bounds = array<i64: 128, 128>}, {pipeline_mode = #tpu.pipeline_mode<synchronous>, transform_indices = @transform_1, window_bounds = array<i64: 128, 128>}, {pipeline_mode = #tpu.pipeline_mode<synchronous>, transform_indices = @transform_2, window_bounds = array<i64: 128, 128>}, {pipeline_mode = #tpu.pipeline_mode<synchronous>, transform_indices = @transform_3, window_bounds = array<i64: 1, 128>}, {pipeline_mode = #tpu.pipeline_mode<synchronous>, transform_indices = @transform_4, window_bounds = array<i64: 128, 128>}, {pipeline_mode = #tpu.pipeline_mode<synchronous>, transform_indices = @transform_5, window_bounds = array<i64: 1, 128>}, {pipeline_mode = #tpu.pipeline_mode<synchronous>, transform_indices = @transform_6, window_bounds = array<i64: 128, 128>}]} {
    %c0 = arith.constant 0 : index
    %c0_0 = arith.constant 0 : index
    %0 = vector.load %arg1[%c0, %c0_0] : memref<128x128xbf16, #tpu.memory_space<vmem>>, vector<128x128xbf16>
    %c0_1 = arith.constant 0 : index
    %c0_2 = arith.constant 0 : index
    %1 = vector.load %arg2[%c0_1, %c0_2] : memref<128x128xbf16, #tpu.memory_space<vmem>>, vector<128x128xbf16>
    %c0_3 = arith.constant 0 : index
    %c0_4 = arith.constant 0 : index
    %2 = vector.load %arg3[%c0_3, %c0_4] : memref<128x128xbf16, #tpu.memory_space<vmem>>, vector<128x128xbf16>
    %cst = arith.constant dense<0.000000e+00> : vector<128x128xf32>
    %3 = tpu.matmul %1, %2, %cst {dimension_numbers = #tpu.dot_dimension_numbers<[1], [0], [0], [1], [0, 0, 1, 1], [], []>} : vector<128x128xbf16>, vector<128x128xbf16>, vector<128x128xf32> -> vector<128x128xf32>
    %4 = arith.truncf %3 : vector<128x128xf32> to vector<128x128xbf16>
    %cst_5 = arith.constant dense<0.000000e+00> : vector<128x128xf32>
    %5 = tpu.matmul %0, %4, %cst_5 {dimension_numbers = #tpu.dot_dimension_numbers<[1], [0], [0], [1], [0, 0, 1, 1], [], []>} : vector<128x128xbf16>, vector<128x128xbf16>, vector<128x128xf32> -> vector<128x128xf32>
    %c0_6 = arith.constant 0 : index
    %c0_7 = arith.constant 0 : index
    %6 = vector.load %arg4[%c0_6, %c0_7] : memref<1x128xf32, #tpu.memory_space<vmem>>, vector<1x128xf32>
    %7 = vector.broadcast %6 : vector<1x128xf32> to vector<128x128xf32>
    %8 = arith.addf %5, %7 : vector<128x128xf32>
    %cst_8 = arith.constant 0.000000e+00 : f32
    %9 = vector.broadcast %cst_8 : f32 to vector<128x128xf32>
    %10 = arith.maximumf %8, %9 : vector<128x128xf32>
    %11 = arith.truncf %10 : vector<128x128xf32> to vector<128x128xbf16>
    %c0_9 = arith.constant 0 : index
    %c0_10 = arith.constant 0 : index
    %12 = vector.load %arg5[%c0_9, %c0_10] : memref<128x128xbf16, #tpu.memory_space<vmem>>, vector<128x128xbf16>
    %cst_11 = arith.constant dense<0.000000e+00> : vector<128x128xf32>
    %13 = tpu.matmul %11, %12, %cst_11 {dimension_numbers = #tpu.dot_dimension_numbers<[1], [0], [0], [1], [0, 0, 1, 1], [], []>} : vector<128x128xbf16>, vector<128x128xbf16>, vector<128x128xf32> -> vector<128x128xf32>
    %14 = arith.truncf %13 : vector<128x128xf32> to vector<128x128xbf16>
    %cst_12 = arith.constant dense<0.000000e+00> : vector<128x128xf32>
    %15 = tpu.matmul %0, %14, %cst_12 {dimension_numbers = #tpu.dot_dimension_numbers<[1], [0], [0], [1], [0, 0, 1, 1], [], []>} : vector<128x128xbf16>, vector<128x128xbf16>, vector<128x128xf32> -> vector<128x128xf32>
    %c0_13 = arith.constant 0 : index
    %c0_14 = arith.constant 0 : index
    %16 = vector.load %arg6[%c0_13, %c0_14] : memref<1x128xf32, #tpu.memory_space<vmem>>, vector<1x128xf32>
    %17 = vector.broadcast %16 : vector<1x128xf32> to vector<128x128xf32>
    %18 = arith.addf %15, %17 : vector<128x128xf32>
    %cst_15 = arith.constant 0.000000e+00 : f32
    %19 = vector.broadcast %cst_15 : f32 to vector<128x128xf32>
    %20 = arith.maximumf %18, %19 : vector<128x128xf32>
    %21 = arith.truncf %20 : vector<128x128xf32> to vector<128x128xbf16>
    %c0_16 = arith.constant 0 : index
    %c0_17 = arith.constant 0 : index
    %22 = vector.load %arg7[%c0_16, %c0_17] : memref<128x128xbf16, #tpu.memory_space<vmem>>, vector<128x128xbf16>
    tpu.vector_store %arg7[%c0_16, %c0_17], %21 {strides = array<i32>} : memref<128x128xbf16, #tpu.memory_space<vmem>>, vector<128x128xbf16>,
    return
  }
  func.func @transform_0(%arg0: i32) -> (i32, i32) {
    %c0_i32 = arith.constant 0 : i32
    %c0_i32_0 = arith.constant 0 : i32
    %c0_i32_1 = arith.constant 0 : i32
    return %c0_i32, %c0_i32_0 : i32, i32
  }
  func.func @transform_1(%arg0: i32) -> (i32, i32) {
    %c0_i32 = arith.constant 0 : i32
    %c0_i32_0 = arith.constant 0 : i32
    %c0_i32_1 = arith.constant 0 : i32
    return %c0_i32, %c0_i32_0 : i32, i32
  }
  func.func @transform_2(%arg0: i32) -> (i32, i32) {
    %c0_i32 = arith.constant 0 : i32
    %c0_i32_0 = arith.constant 0 : i32
    %c0_i32_1 = arith.constant 0 : i32
    return %c0_i32, %c0_i32_0 : i32, i32
  }
  func.func @transform_3(%arg0: i32) -> (i32, i32) {
    %c0_i32 = arith.constant 0 : i32
    %c0_i32_0 = arith.constant 0 : i32
    %c0_i32_1 = arith.constant 0 : i32
    return %c0_i32, %c0_i32_0 : i32, i32
  }
  func.func @transform_4(%arg0: i32) -> (i32, i32) {
    %c0_i32 = arith.constant 0 : i32
    %c0_i32_0 = arith.constant 0 : i32
    %c0_i32_1 = arith.constant 0 : i32
    return %c0_i32, %c0_i32_0 : i32, i32
  }
  func.func @transform_5(%arg0: i32) -> (i32, i32) {
    %c0_i32 = arith.constant 0 : i32
    %c0_i32_0 = arith.constant 0 : i32
    %c0_i32_1 = arith.constant 0 : i32
    return %c0_i32, %c0_i32_0 : i32, i32
  }
  func.func @transform_6(%arg0: i32) -> (i32, i32) {
    %c0_i32 = arith.constant 0 : i32
    %c0_i32_0 = arith.constant 0 : i32
    %c0_i32_1 = arith.constant 0 : i32
    return %c0_i32, %c0_i32_0 : i32, i32
  }
}

</mosaic_0001>

<llo_original>
// kernel: tpu_custom_call.1
$region0: #{tpu_custom_call.1}
  #allocation0 [shape = 'u32[]', space=smem, size = 0x4, offset = 0x4, fixed_abs, tag = 'smem constant byte address 0x4 - core index']
  #allocation1 [shape = 'u32[144,128]{1,0:T(1,128)}', space=vmem, size = 0x12000, scoped, tag = 'internal scratch']
  %s0 = inlined_call_operand.hbm [shape: bf16[128,128], index: 0, kind: input, shape index: {}]
  %s1 = inlined_call_operand.hbm [shape: bf16[128,128], index: 1, kind: input, shape index: {}]
  %s2 = inlined_call_operand.hbm [shape: bf16[128,128], index: 2, kind: input, shape index: {}]
  %s3 = inlined_call_operand.vmem [shape: f32[1,128], index: 3, kind: input, shape index: {}]
  %s4 = inlined_call_operand.hbm [shape: bf16[128,128], index: 4, kind: input, shape index: {}]
  %s5 = inlined_call_operand.vmem [shape: f32[1,128], index: 5, kind: input, shape index: {}]
  %s6 = inlined_call_operand.hbm [shape: bf16[128,128], index: 6, kind: output, shape index: {}]
  %s7 = sld [smem:[#allocation0]]
  $region50: #{tpu_custom_call.1} parent=0
    _
  %s9 = ssub.s32 1, %s7
  %s10 = scalar_select 0, %s9, %s7
  $region1: #{tpu_custom_call.1} parent=0
    #allocation2 [shape = 'u8[32768]{0}', space=vmem, size = 0x8000, scoped, tag = 'input window, operand 0, single buffered']
    #allocation3 [shape = 's32[1]{0}', space=sflag, size = 0x4, scoped, tag = 'scoped memory for tpu_custom_call.1']
    #allocation4 [shape = 's32[1]{0}', space=sflag, size = 0x4, scoped, tag = 'scoped memory for tpu_custom_call.1']
    #allocation5 [shape = 'u8[32768]{0}', space=vmem, size = 0x8000, scoped, tag = 'input window, operand 1, single buffered']
    #allocation6 [shape = 's32[1]{0}', space=sflag, size = 0x4, scoped, tag = 'scoped memory for tpu_custom_call.1']
    #allocation7 [shape = 'u8[32768]{0}', space=vmem, size = 0x8000, scoped, tag = 'input window, operand 2, single buffered']
    #allocation8 [shape = 'u8[32768]{0}', space=vmem, size = 0x8000, scoped, tag = 'input window, operand 4, single buffered']
    #allocation9 [shape = 's32[1]{0}', space=sflag, size = 0x4, scoped, tag = 'scoped memory for tpu_custom_call.1']
    #allocation10 [shape = 'u8[32768]{0}', space=vmem, size = 0x8000, scoped, tag = 'output window, operand 0, single buffered']
    %11 = vsyncpa [#allocation3], 0
    %12 = vsyncpa [#allocation6], 0
    %13 = vsyncpa [#allocation9], 0
    %14 = vsyncpa [#allocation4], 0
    // Predicated region
    $region2: #{tpu_custom_call.1} parent=1 // pred_check
      _
    $region3: #{tpu_custom_call.1} parent=1 // pred_check_branch
      %16 = sbr.rel (0) target = $region5
    $region4: #{tpu_custom_call.1} parent=1 // pred_region
      %s18 = ssub.s32 1024, 1024
      %19 = vsyncadd [#allocation3], %s18
      %s20 = sshll.u32 [#allocation2], 4
      %s21 = int_to_ptr.vmem [resolvable:$true] %s20
      %26 = dma.hbm_to_vmem [thread:$0]  %s0, 1024, %s21, [#allocation3], 64, 64, 4
    $region5: #{tpu_custom_call.1} parent=1 // pred_fallthru
      _
    // Predicated region
    $region6: #{tpu_custom_call.1} parent=1 // pred_check
      _
    $region7: #{tpu_custom_call.1} parent=1 // pred_check_branch
      %28 = sbr.rel (0) target = $region9
    $region8: #{tpu_custom_call.1} parent=1 // pred_region
      %s30 = ssub.s32 1024, 1024
      %31 = vsyncadd [#allocation6], %s30
      %s32 = sshll.u32 [#allocation5], 4
      %s33 = int_to_ptr.vmem [resolvable:$true] %s32
      %38 = dma.hbm_to_vmem [thread:$0]  %s1, 1024, %s33, [#allocation6], 64, 64, 4
    $region9: #{tpu_custom_call.1} parent=1 // pred_fallthru
      _
    // Predicated region
    $region10: #{tpu_custom_call.1} parent=1 // pred_check
      _
    $region11: #{tpu_custom_call.1} parent=1 // pred_check_branch
      %40 = sbr.rel (0) target = $region13
    $region12: #{tpu_custom_call.1} parent=1 // pred_region
      %s42 = ssub.s32 1024, 1024
      %43 = vsyncadd [#allocation6], %s42
      %s44 = sshll.u32 [#allocation7], 4
      %s45 = int_to_ptr.vmem [resolvable:$true] %s44
      %50 = dma.hbm_to_vmem [thread:$0]  %s2, 1024, %s45, [#allocation6], 64, 64, 4
    $region13: #{tpu_custom_call.1} parent=1 // pred_fallthru
      _
    // Predicated region
    $region14: #{tpu_custom_call.1} parent=1 // pred_check
      _
    $region15: #{tpu_custom_call.1} parent=1 // pred_check_branch
      %52 = sbr.rel (0) target = $region17
    $region16: #{tpu_custom_call.1} parent=1 // pred_region
      _
    $region17: #{tpu_custom_call.1} parent=1 // pred_fallthru
      _
    // Predicated region
    $region18: #{tpu_custom_call.1} parent=1 // pred_check
      _
    $region19: #{tpu_custom_call.1} parent=1 // pred_check_branch
      %54 = sbr.rel (0) target = $region21
    $region20: #{tpu_custom_call.1} parent=1 // pred_region
      %s56 = ssub.s32 1024, 1024
      %57 = vsyncadd [#allocation9], %s56
      %s58 = sshll.u32 [#allocation8], 4
      %s59 = int_to_ptr.vmem [resolvable:$true] %s58
      %64 = dma.hbm_to_vmem [thread:$0]  %s4, 1024, %s59, [#allocation9], 64, 64, 4
    $region21: #{tpu_custom_call.1} parent=1 // pred_fallthru
      _
    // Predicated region
    $region22: #{tpu_custom_call.1} parent=1 // pred_check
      _
    $region23: #{tpu_custom_call.1} parent=1 // pred_check_branch
      %66 = sbr.rel (0) target = $region25
    $region24: #{tpu_custom_call.1} parent=1 // pred_region
      _
    $region25: #{tpu_custom_call.1} parent=1 // pred_fallthru
      _
    // Predicated region
    $region26: #{tpu_custom_call.1} parent=1 // pred_check
      _
    $region27: #{tpu_custom_call.1} parent=1 // pred_check_branch
      %68 = sbr.rel (0) target = $region29
    $region28: #{tpu_custom_call.1} parent=1 // pred_region
      %69 = dma.done [#allocation3], 1024
    $region29: #{tpu_custom_call.1} parent=1 // pred_fallthru
      _
    // Predicated region
    $region30: #{tpu_custom_call.1} parent=1 // pred_check
      _
    $region31: #{tpu_custom_call.1} parent=1 // pred_check_branch
      %71 = sbr.rel (0) target = $region33
    $region32: #{tpu_custom_call.1} parent=1 // pred_region
      %72 = dma.done [#allocation6], 1024
    $region33: #{tpu_custom_call.1} parent=1 // pred_fallthru
      _
    // Predicated region
    $region34: #{tpu_custom_call.1} parent=1 // pred_check
      _
    $region35: #{tpu_custom_call.1} parent=1 // pred_check_branch
      %74 = sbr.rel (0) target = $region37
    $region36: #{tpu_custom_call.1} parent=1 // pred_region
      %75 = dma.done [#allocation6], 1024
    $region37: #{tpu_custom_call.1} parent=1 // pred_fallthru
      _
    // Predicated region
    $region38: #{tpu_custom_call.1} parent=1 // pred_check
      _
    $region39: #{tpu_custom_call.1} parent=1 // pred_check_branch
      %77 = sbr.rel (0) target = $region41
    $region40: #{tpu_custom_call.1} parent=1 // pred_region
      %78 = dma.done [#allocation9], 1024
    $region41: #{tpu_custom_call.1} parent=1 // pred_fallthru
      _
    %v80 = vld [vmem:[#allocation2] sm:$0xf]
    %v81 = vld [vmem:[#allocation2 + $0x4] sm:$0xf]
    %v82 = vld [vmem:[#allocation2 + $0x8] sm:$0xf]
    %v83 = vld [vmem:[#allocation2 + $0xc] sm:$0xf]
    %v84 = vld [vmem:[#allocation2 + $0x10] sm:$0xf]
    %v85 = vld [vmem:[#allocation2 + $0x14] sm:$0xf]
    %v86 = vld [vmem:[#allocation2 + $0x18] sm:$0xf]
    %v87 = vld [vmem:[#allocation2 + $0x1c] sm:$0xf]
    %v88 = vld [vmem:[#allocation2 + $0x20] sm:$0xf]
    %v89 = vld [vmem:[#allocation2 + $0x24] sm:$0xf]
    %v90 = vld [vmem:[#allocation2 + $0x28] sm:$0xf]
    %v91 = vld [vmem:[#allocation2 + $0x2c] sm:$0xf]
    %v92 = vld [vmem:[#allocation2 + $0x30] sm:$0xf]
    %v93 = vld [vmem:[#allocation2 + $0x34] sm:$0xf]
    %v94 = vld [vmem:[#allocation2 + $0x38] sm:$0xf]
    %v95 = vld [vmem:[#allocation2 + $0x3c] sm:$0xf]
    %v96 = vld [vmem:[#allocation5] sm:$0xf]
    %v97 = vld [vmem:[#allocation5 + $0x4] sm:$0xf]
    %v98 = vld [vmem:[#allocation5 + $0x8] sm:$0xf]
    %v99 = vld [vmem:[#allocation5 + $0xc] sm:$0xf]
    %v100 = vld [vmem:[#allocation5 + $0x10] sm:$0xf]
    %v101 = vld [vmem:[#allocation5 + $0x14] sm:$0xf]
    %v102 = vld [vmem:[#allocation5 + $0x18] sm:$0xf]
    %v103 = vld [vmem:[#allocation5 + $0x1c] sm:$0xf]
    %v104 = vld [vmem:[#allocation5 + $0x20] sm:$0xf]
    %v105 = vld [vmem:[#allocation5 + $0x24] sm:$0xf]
    %v106 = vld [vmem:[#allocation5 + $0x28] sm:$0xf]
    %v107 = vld [vmem:[#allocation5 + $0x2c] sm:$0xf]
    %v108 = vld [vmem:[#allocation5 + $0x30] sm:$0xf]
    %v109 = vld [vmem:[#allocation5 + $0x34] sm:$0xf]
    %v110 = vld [vmem:[#allocation5 + $0x38] sm:$0xf]
    %v111 = vld [vmem:[#allocation5 + $0x3c] sm:$0xf]
    %v112 = vld [vmem:[#allocation7] sm:$0xf]
    %v113 = vld [vmem:[#allocation7 + $0x4] sm:$0xf]
    %v114 = vld [vmem:[#allocation7 + $0x8] sm:$0xf]
    %v115 = vld [vmem:[#allocation7 + $0xc] sm:$0xf]
    %v116 = vld [vmem:[#allocation7 + $0x10] sm:$0xf]
    %v117 = vld [vmem:[#allocation7 + $0x14] sm:$0xf]
    %v118 = vld [vmem:[#allocation7 + $0x18] sm:$0xf]
    %v119 = vld [vmem:[#allocation7 + $0x1c] sm:$0xf]
    %v120 = vld [vmem:[#allocation7 + $0x20] sm:$0xf]
    %v121 = vld [vmem:[#allocation7 + $0x24] sm:$0xf]
    %v122 = vld [vmem:[#allocation7 + $0x28] sm:$0xf]
    %v123 = vld [vmem:[#allocation7 + $0x2c] sm:$0xf]
    %v124 = vld [vmem:[#allocation7 + $0x30] sm:$0xf]
    %v125 = vld [vmem:[#allocation7 + $0x34] sm:$0xf]
    %v126 = vld [vmem:[#allocation7 + $0x38] sm:$0xf]
    %v127 = vld [vmem:[#allocation7 + $0x3c] sm:$0xf]
    %v144 = vunpack.c.l.b16 %v96
    %v145 = vunpack.c.l.b16 %v97
    %v146 = vunpack.c.l.b16 %v98
    %v147 = vunpack.c.l.b16 %v99
    %v148 = vunpack.c.l.b16 %v100
    %v149 = vunpack.c.l.b16 %v101
    %v150 = vunpack.c.l.b16 %v102
    %v151 = vunpack.c.l.b16 %v103
    %v152 = vunpack.c.l.b16 %v104
    %v153 = vunpack.c.l.b16 %v105
    %v154 = vunpack.c.l.b16 %v106
    %v155 = vunpack.c.l.b16 %v107
    %v156 = vunpack.c.l.b16 %v108
    %v157 = vunpack.c.l.b16 %v109
    %v158 = vunpack.c.l.b16 %v110
    %v159 = vunpack.c.l.b16 %v111
    %v160 = vpack.c.b16 %v145, %v144
    %v161 = vpack.c.b16 %v147, %v146
    %v162 = vpack.c.b16 %v149, %v148
    %v163 = vpack.c.b16 %v151, %v150
    %v164 = vpack.c.b16 %v153, %v152
    %v165 = vpack.c.b16 %v155, %v154
    %v166 = vpack.c.b16 %v157, %v156
    %v167 = vpack.c.b16 %v159, %v158
    %v192 = vunpack.c.l.b16 %v112
    %v193 = vunpack.c.l.b16 %v113
    %v194 = vunpack.c.l.b16 %v114
    %v195 = vunpack.c.l.b16 %v115
    %v196 = vunpack.c.l.b16 %v116
    %v197 = vunpack.c.l.b16 %v117
    %v198 = vunpack.c.l.b16 %v118
    %v199 = vunpack.c.l.b16 %v119
    %v200 = vunpack.c.l.b16 %v120
    %v201 = vunpack.c.l.b16 %v121
    %v202 = vunpack.c.l.b16 %v122
    %v203 = vunpack.c.l.b16 %v123
    %v204 = vunpack.c.l.b16 %v124
    %v205 = vunpack.c.l.b16 %v125
    %v206 = vunpack.c.l.b16 %v126
    %v207 = vunpack.c.l.b16 %v127
    %v208 = vpack.c.b16 %v193, %v192
    %v209 = vpack.c.b16 %v195, %v194
    %v210 = vpack.c.b16 %v197, %v196
    %v211 = vpack.c.b16 %v199, %v198
    %v212 = vpack.c.b16 %v201, %v200
    %v213 = vpack.c.b16 %v203, %v202
    %v214 = vpack.c.b16 %v205, %v204
    %v215 = vpack.c.b16 %v207, %v206
    %224 = vmatprep.subr.bf16.mxu0 0
    %225 = vmatpush1.bf16.msra.mxu0 %v215
    %226 = vmatprep.subr.bf16.mxu0 0
    %227 = vmatpush1.bf16.msra.mxu0 %v214
    %228 = vmatprep.subr.bf16.mxu0 0
    %229 = vmatpush1.bf16.msra.mxu0 %v213
    %230 = vmatprep.subr.bf16.mxu0 0
    %231 = vmatpush1.bf16.msra.mxu0 %v212
    %232 = vmatprep.subr.bf16.mxu0 0
    %233 = vmatpush1.bf16.msra.mxu0 %v211
    %234 = vmatprep.subr.bf16.mxu0 0
    %235 = vmatpush1.bf16.msra.mxu0 %v210
    %236 = vmatprep.subr.bf16.mxu0 0
    %237 = vmatpush1.bf16.msra.mxu0 %v209
    %238 = vmatprep.subr.bf16.mxu0 0
    %239 = vmatpush1.bf16.msra.mxu0 %v208
    %240 = vmatprep.subr.bf16.mxu0 0
    %241 = vmatpush2.bf16.msra.mxu0 0
    %242 = vmatprep.subr.bf16.mxu0 0
    %243 = vmatpush2.bf16.msra.mxu0 0
    %244 = vmatprep.subr.bf16.mxu0 0
    %245 = vmatpush2.bf16.msra.mxu0 0
    %246 = vmatprep.subr.bf16.mxu0 0
    %247 = vmatpush2.bf16.msra.mxu0 0
    %248 = vmatprep.subr.bf16.mxu0 0
    %249 = vmatpush2.bf16.msra.mxu0 0
    %250 = vmatprep.subr.bf16.mxu0 0
    %251 = vmatpush2.bf16.msra.mxu0 0
    %252 = vmatprep.subr.bf16.mxu0 0
    %253 = vmatpush2.bf16.msra.mxu0 0
    %254 = vmatprep.subr.bf16.mxu0 0
    %255 = vmatpush2.bf16.msra.mxu0 0
    %256 = vmatprep.mubr.bf16.mxu0 0
    %257 = vmatmul.mubr.bf16.gmra.mxu0 %v160
    %v258 = vpop.f32.mrf.mxu0
    %v259 = vadd.f32 0.0, %v258
    %v260 = vpop.f32.mrf.mxu0
    %v261 = vpop.f32.mrf.mxu0
    %v262 = vadd.f32 0.0, %v261
    %v263 = vpop.f32.mrf.mxu0
    %264 = vmatprep.mubr.bf16.mxu0 0
    %265 = vmatmul.mubr.bf16.gmra.mxu0 %v161
    %v266 = vpop.f32.mrf.mxu0
    %v267 = vadd.f32 0.0, %v266
    %v268 = vpop.f32.mrf.mxu0
    %v269 = vpop.f32.mrf.mxu0
    %v270 = vadd.f32 0.0, %v269
    %v271 = vpop.f32.mrf.mxu0
    %272 = vmatprep.mubr.bf16.mxu0 0
    %273 = vmatmul.mubr.bf16.gmra.mxu0 %v162
    %v274 = vpop.f32.mrf.mxu0
    %v275 = vadd.f32 0.0, %v274
    %v276 = vpop.f32.mrf.mxu0
    %v277 = vpop.f32.mrf.mxu0
    %v278 = vadd.f32 0.0, %v277
    %v279 = vpop.f32.mrf.mxu0
    %280 = vmatprep.mubr.bf16.mxu0 0
    %281 = vmatmul.mubr.bf16.gmra.mxu0 %v163
    %v282 = vpop.f32.mrf.mxu0
    %v283 = vadd.f32 0.0, %v282
    %v284 = vpop.f32.mrf.mxu0
    %v285 = vpop.f32.mrf.mxu0
    %v286 = vadd.f32 0.0, %v285
    %v287 = vpop.f32.mrf.mxu0
    %288 = vmatprep.mubr.bf16.mxu0 0
    %289 = vmatmul.mubr.bf16.gmra.mxu0 %v164
    %v290 = vpop.f32.mrf.mxu0
    %v291 = vadd.f32 0.0, %v290
    %v292 = vpop.f32.mrf.mxu0
    %v293 = vpop.f32.mrf.mxu0
    %v294 = vadd.f32 0.0, %v293
    %v295 = vpop.f32.mrf.mxu0
    %296 = vmatprep.mubr.bf16.mxu0 0
    %297 = vmatmul.mubr.bf16.gmra.mxu0 %v165
    %v298 = vpop.f32.mrf.mxu0
    %v299 = vadd.f32 0.0, %v298
    %v300 = vpop.f32.mrf.mxu0
    %v301 = vpop.f32.mrf.mxu0
    %v302 = vadd.f32 0.0, %v301
    %v303 = vpop.f32.mrf.mxu0
    %304 = vmatprep.mubr.bf16.mxu0 0
    %305 = vmatmul.mubr.bf16.gmra.mxu0 %v166
    %v306 = vpop.f32.mrf.mxu0
    %v307 = vadd.f32 0.0, %v306
    %v308 = vpop.f32.mrf.mxu0
    %v309 = vpop.f32.mrf.mxu0
    %v310 = vadd.f32 0.0, %v309
    %v311 = vpop.f32.mrf.mxu0
    %312 = vmatprep.mubr.bf16.mxu0 0
    %313 = vmatmul.mubr.bf16.gmra.mxu0 %v167
    %v314 = vpop.f32.mrf.mxu0
    %v315 = vadd.f32 0.0, %v314
    %v316 = vpop.f32.mrf.mxu0
    %v317 = vpop.f32.mrf.mxu0
    %v318 = vadd.f32 0.0, %v317
    %v319 = vpop.f32.mrf.mxu0
    %320 = vdwg.mxu0
    %v321 = vpack.c.bf16 %v262, %v259
    %v322 = vpack.c.bf16 %v270, %v267
    %v323 = vpack.c.bf16 %v278, %v275
    %v324 = vpack.c.bf16 %v286, %v283
    %v325 = vpack.c.bf16 %v294, %v291
    %v326 = vpack.c.bf16 %v302, %v299
    %v327 = vpack.c.bf16 %v310, %v307
    %v328 = vpack.c.bf16 %v318, %v315
    %v329 = vld [vmem:[%s3] sm:$0x1]
    %v331 = vlaneseq
    %v332 = vshrl.u32 %v331, 7
    %v333 = vsub.s32 0, %v332
    %v334 = vrot.slane %v329, %v333
    %v352 = vunpack.c.l.b16 %v80
    %v353 = vunpack.c.l.b16 %v81
    %v354 = vunpack.c.l.b16 %v82
    %v355 = vunpack.c.l.b16 %v83
    %v356 = vunpack.c.l.b16 %v84
    %v357 = vunpack.c.l.b16 %v85
    %v358 = vunpack.c.l.b16 %v86
    %v359 = vunpack.c.l.b16 %v87
    %v360 = vunpack.c.l.b16 %v88
    %v361 = vunpack.c.l.b16 %v89
    %v362 = vunpack.c.l.b16 %v90
    %v363 = vunpack.c.l.b16 %v91
    %v364 = vunpack.c.l.b16 %v92
    %v365 = vunpack.c.l.b16 %v93
    %v366 = vunpack.c.l.b16 %v94
    %v367 = vunpack.c.l.b16 %v95
    %v368 = vpack.c.b16 %v353, %v352
    %v369 = vpack.c.b16 %v355, %v354
    %v370 = vpack.c.b16 %v357, %v356
    %v371 = vpack.c.b16 %v359, %v358
    %v372 = vpack.c.b16 %v361, %v360
    %v373 = vpack.c.b16 %v363, %v362
    %v374 = vpack.c.b16 %v365, %v364
    %v375 = vpack.c.b16 %v367, %v366
    %384 = vmatprep.subr.bf16.mxu0 0
    %385 = vmatpush1.bf16.msra.mxu0 %v328
    %386 = vmatprep.subr.bf16.mxu0 0
    %387 = vmatpush1.bf16.msra.mxu0 %v327
    %388 = vmatprep.subr.bf16.mxu0 0
    %389 = vmatpush1.bf16.msra.mxu0 %v326
    %390 = vmatprep.subr.bf16.mxu0 0
    %391 = vmatpush1.bf16.msra.mxu0 %v325
    %392 = vmatprep.subr.bf16.mxu0 0
    %393 = vmatpush1.bf16.msra.mxu0 %v324
    %394 = vmatprep.subr.bf16.mxu0 0
    %395 = vmatpush1.bf16.msra.mxu0 %v323
    %396 = vmatprep.subr.bf16.mxu0 0
    %397 = vmatpush1.bf16.msra.mxu0 %v322
    %398 = vmatprep.subr.bf16.mxu0 0
    %399 = vmatpush1.bf16.msra.mxu0 %v321
    %400 = vmatprep.subr.bf16.mxu0 0
    %401 = vmatpush2.bf16.msra.mxu0 0
    %402 = vmatprep.subr.bf16.mxu0 0
    %403 = vmatpush2.bf16.msra.mxu0 0
    %404 = vmatprep.subr.bf16.mxu0 0
    %405 = vmatpush2.bf16.msra.mxu0 0
    %406 = vmatprep.subr.bf16.mxu0 0
    %407 = vmatpush2.bf16.msra.mxu0 0
    %408 = vmatprep.subr.bf16.mxu0 0
    %409 = vmatpush2.bf16.msra.mxu0 0
    %410 = vmatprep.subr.bf16.mxu0 0
    %411 = vmatpush2.bf16.msra.mxu0 0
    %412 = vmatprep.subr.bf16.mxu0 0
    %413 = vmatpush2.bf16.msra.mxu0 0
    %414 = vmatprep.subr.bf16.mxu0 0
    %415 = vmatpush2.bf16.msra.mxu0 0
    %416 = vmatprep.mubr.bf16.mxu0 0
    %417 = vmatmul.mubr.bf16.gmra.mxu0 %v368
    %v418 = vpop.f32.mrf.mxu0
    %v419 = vadd.f32 %v334, %v418
    %v420 = vpop.f32.mrf.mxu0
    %v421 = vpop.f32.mrf.mxu0
    %v422 = vadd.f32 %v334, %v421
    %v423 = vpop.f32.mrf.mxu0
    %424 = vmatprep.mubr.bf16.mxu0 0
    %425 = vmatmul.mubr.bf16.gmra.mxu0 %v369
    %v426 = vpop.f32.mrf.mxu0
    %v427 = vadd.f32 %v334, %v426
    %v428 = vpop.f32.mrf.mxu0
    %v429 = vpop.f32.mrf.mxu0
    %v430 = vadd.f32 %v334, %v429
    %v431 = vpop.f32.mrf.mxu0
    %432 = vmatprep.mubr.bf16.mxu0 0
    %433 = vmatmul.mubr.bf16.gmra.mxu0 %v370
    %v434 = vpop.f32.mrf.mxu0
    %v435 = vadd.f32 %v334, %v434
    %v436 = vpop.f32.mrf.mxu0
    %v437 = vpop.f32.mrf.mxu0
    %v438 = vadd.f32 %v334, %v437
    %v439 = vpop.f32.mrf.mxu0
    %440 = vmatprep.mubr.bf16.mxu0 0
    %441 = vmatmul.mubr.bf16.gmra.mxu0 %v371
    %v442 = vpop.f32.mrf.mxu0
    %v443 = vadd.f32 %v334, %v442
    %v444 = vpop.f32.mrf.mxu0
    %v445 = vpop.f32.mrf.mxu0
    %v446 = vadd.f32 %v334, %v445
    %v447 = vpop.f32.mrf.mxu0
    %448 = vmatprep.mubr.bf16.mxu0 0
    %449 = vmatmul.mubr.bf16.gmra.mxu0 %v372
    %v450 = vpop.f32.mrf.mxu0
    %v451 = vadd.f32 %v334, %v450
    %v452 = vpop.f32.mrf.mxu0
    %v453 = vpop.f32.mrf.mxu0
    %v454 = vadd.f32 %v334, %v453
    %v455 = vpop.f32.mrf.mxu0
    %456 = vmatprep.mubr.bf16.mxu0 0
    %457 = vmatmul.mubr.bf16.gmra.mxu0 %v373
    %v458 = vpop.f32.mrf.mxu0
    %v459 = vadd.f32 %v334, %v458
    %v460 = vpop.f32.mrf.mxu0
    %v461 = vpop.f32.mrf.mxu0
    %v462 = vadd.f32 %v334, %v461
    %v463 = vpop.f32.mrf.mxu0
    %464 = vmatprep.mubr.bf16.mxu0 0
    %465 = vmatmul.mubr.bf16.gmra.mxu0 %v374
    %v466 = vpop.f32.mrf.mxu0
    %v467 = vadd.f32 %v334, %v466
    %v468 = vpop.f32.mrf.mxu0
    %v469 = vpop.f32.mrf.mxu0
    %v470 = vadd.f32 %v334, %v469
    %v471 = vpop.f32.mrf.mxu0
    %472 = vmatprep.mubr.bf16.mxu0 0
    %473 = vmatmul.mubr.bf16.gmra.mxu0 %v375
    %v474 = vpop.f32.mrf.mxu0
    %v475 = vadd.f32 %v334, %v474
    %v476 = vpop.f32.mrf.mxu0
    %v477 = vpop.f32.mrf.mxu0
    %v478 = vadd.f32 %v334, %v477
    %v479 = vpop.f32.mrf.mxu0
    %480 = vdwg.mxu0
    %v481 = vmax.f32 %v419, 0.0
    %v482 = vmax.f32 %v422, 0.0
    %v483 = vmax.f32 %v427, 0.0
    %v484 = vmax.f32 %v430, 0.0
    %v485 = vmax.f32 %v435, 0.0
    %v486 = vmax.f32 %v438, 0.0
    %v487 = vmax.f32 %v443, 0.0
    %v488 = vmax.f32 %v446, 0.0
    %v489 = vmax.f32 %v451, 0.0
    %v490 = vmax.f32 %v454, 0.0
    %v491 = vmax.f32 %v459, 0.0
    %v492 = vmax.f32 %v462, 0.0
    %v493 = vmax.f32 %v467, 0.0
    %v494 = vmax.f32 %v470, 0.0
    %v495 = vmax.f32 %v475, 0.0
    %v496 = vmax.f32 %v478, 0.0
    %v497 = vpack.c.bf16 %v482, %v481
    %v498 = vpack.c.bf16 %v484, %v483
    %v499 = vpack.c.bf16 %v486, %v485
    %v500 = vpack.c.bf16 %v488, %v487
    %v501 = vpack.c.bf16 %v490, %v489
    %v502 = vpack.c.bf16 %v492, %v491
    %v503 = vpack.c.bf16 %v494, %v493
    %v504 = vpack.c.bf16 %v496, %v495
    %v505 = vld [vmem:[#allocation8] sm:$0xf]
    %v506 = vld [vmem:[#allocation8 + $0x4] sm:$0xf]
    %v507 = vld [vmem:[#allocation8 + $0x8] sm:$0xf]
    %v508 = vld [vmem:[#allocation8 + $0xc] sm:$0xf]
    %v509 = vld [vmem:[#allocation8 + $0x10] sm:$0xf]
    %v510 = vld [vmem:[#allocation8 + $0x14] sm:$0xf]
    %v511 = vld [vmem:[#allocation8 + $0x18] sm:$0xf]
    %v512 = vld [vmem:[#allocation8 + $0x1c] sm:$0xf]
    %v513 = vld [vmem:[#allocation8 + $0x20] sm:$0xf]
    %v514 = vld [vmem:[#allocation8 + $0x24] sm:$0xf]
    %v515 = vld [vmem:[#allocation8 + $0x28] sm:$0xf]
    %v516 = vld [vmem:[#allocation8 + $0x2c] sm:$0xf]
    %v517 = vld [vmem:[#allocation8 + $0x30] sm:$0xf]
    %v518 = vld [vmem:[#allocation8 + $0x34] sm:$0xf]
    %v519 = vld [vmem:[#allocation8 + $0x38] sm:$0xf]
    %v520 = vld [vmem:[#allocation8 + $0x3c] sm:$0xf]
    %v537 = vunpack.c.l.b16 %v505
    %v538 = vunpack.c.l.b16 %v506
    %v539 = vunpack.c.l.b16 %v507
    %v540 = vunpack.c.l.b16 %v508
    %v541 = vunpack.c.l.b16 %v509
    %v542 = vunpack.c.l.b16 %v510
    %v543 = vunpack.c.l.b16 %v511
    %v544 = vunpack.c.l.b16 %v512
    %v545 = vunpack.c.l.b16 %v513
    %v546 = vunpack.c.l.b16 %v514
    %v547 = vunpack.c.l.b16 %v515
    %v548 = vunpack.c.l.b16 %v516
    %v549 = vunpack.c.l.b16 %v517
    %v550 = vunpack.c.l.b16 %v518
    %v551 = vunpack.c.l.b16 %v519
    %v552 = vunpack.c.l.b16 %v520
    %v553 = vpack.c.b16 %v538, %v537
    %v554 = vpack.c.b16 %v540, %v539
    %v555 = vpack.c.b16 %v542, %v541
    %v556 = vpack.c.b16 %v544, %v543
    %v557 = vpack.c.b16 %v546, %v545
    %v558 = vpack.c.b16 %v548, %v547
    %v559 = vpack.c.b16 %v550, %v549
    %v560 = vpack.c.b16 %v552, %v551
    %569 = vmatprep.subr.bf16.mxu0 0
    %570 = vmatpush1.bf16.msra.mxu0 %v560
    %571 = vmatprep.subr.bf16.mxu0 0
    %572 = vmatpush1.bf16.msra.mxu0 %v559
    %573 = vmatprep.subr.bf16.mxu0 0
    %574 = vmatpush1.bf16.msra.mxu0 %v558
    %575 = vmatprep.subr.bf16.mxu0 0
    %576 = vmatpush1.bf16.msra.mxu0 %v557
    %577 = vmatprep.subr.bf16.mxu0 0
    %578 = vmatpush1.bf16.msra.mxu0 %v556
    %579 = vmatprep.subr.bf16.mxu0 0
    %580 = vmatpush1.bf16.msra.mxu0 %v555
    %581 = vmatprep.subr.bf16.mxu0 0
    %582 = vmatpush1.bf16.msra.mxu0 %v554
    %583 = vmatprep.subr.bf16.mxu0 0
    %584 = vmatpush1.bf16.msra.mxu0 %v553
    %585 = vmatprep.subr.bf16.mxu0 0
    %586 = vmatpush2.bf16.msra.mxu0 0
    %587 = vmatprep.subr.bf16.mxu0 0
    %588 = vmatpush2.bf16.msra.mxu0 0
    %589 = vmatprep.subr.bf16.mxu0 0
    %590 = vmatpush2.bf16.msra.mxu0 0
    %591 = vmatprep.subr.bf16.mxu0 0
    %592 = vmatpush2.bf16.msra.mxu0 0
    %593 = vmatprep.subr.bf16.mxu0 0
    %594 = vmatpush2.bf16.msra.mxu0 0
    %595 = vmatprep.subr.bf16.mxu0 0
    %596 = vmatpush2.bf16.msra.mxu0 0
    %597 = vmatprep.subr.bf16.mxu0 0
    %598 = vmatpush2.bf16.msra.mxu0 0
    %599 = vmatprep.subr.bf16.mxu0 0
    %600 = vmatpush2.bf16.msra.mxu0 0
    %601 = vmatprep.mubr.bf16.mxu0 0
    %602 = vmatmul.mubr.bf16.gmra.mxu0 %v497
    %v603 = vpop.f32.mrf.mxu0
    %v604 = vadd.f32 0.0, %v603
    %v605 = vpop.f32.mrf.mxu0
    %v606 = vpop.f32.mrf.mxu0
    %v607 = vadd.f32 0.0, %v606
    %v608 = vpop.f32.mrf.mxu0
    %609 = vmatprep.mubr.bf16.mxu0 0
    %610 = vmatmul.mubr.bf16.gmra.mxu0 %v498
    %v611 = vpop.f32.mrf.mxu0
    %v612 = vadd.f32 0.0, %v611
    %v613 = vpop.f32.mrf.mxu0
    %v614 = vpop.f32.mrf.mxu0
    %v615 = vadd.f32 0.0, %v614
    %v616 = vpop.f32.mrf.mxu0
    %617 = vmatprep.mubr.bf16.mxu0 0
    %618 = vmatmul.mubr.bf16.gmra.mxu0 %v499
    %v619 = vpop.f32.mrf.mxu0
    %v620 = vadd.f32 0.0, %v619
    %v621 = vpop.f32.mrf.mxu0
    %v622 = vpop.f32.mrf.mxu0
    %v623 = vadd.f32 0.0, %v622
    %v624 = vpop.f32.mrf.mxu0
    %625 = vmatprep.mubr.bf16.mxu0 0
    %626 = vmatmul.mubr.bf16.gmra.mxu0 %v500
    %v627 = vpop.f32.mrf.mxu0
    %v628 = vadd.f32 0.0, %v627
    %v629 = vpop.f32.mrf.mxu0
    %v630 = vpop.f32.mrf.mxu0
    %v631 = vadd.f32 0.0, %v630
    %v632 = vpop.f32.mrf.mxu0
    %633 = vmatprep.mubr.bf16.mxu0 0
    %634 = vmatmul.mubr.bf16.gmra.mxu0 %v501
    %v635 = vpop.f32.mrf.mxu0
    %v636 = vadd.f32 0.0, %v635
    %v637 = vpop.f32.mrf.mxu0
    %v638 = vpop.f32.mrf.mxu0
    %v639 = vadd.f32 0.0, %v638
    %v640 = vpop.f32.mrf.mxu0
    %641 = vmatprep.mubr.bf16.mxu0 0
    %642 = vmatmul.mubr.bf16.gmra.mxu0 %v502
    %v643 = vpop.f32.mrf.mxu0
    %v644 = vadd.f32 0.0, %v643
    %v645 = vpop.f32.mrf.mxu0
    %v646 = vpop.f32.mrf.mxu0
    %v647 = vadd.f32 0.0, %v646
    %v648 = vpop.f32.mrf.mxu0
    %649 = vmatprep.mubr.bf16.mxu0 0
    %650 = vmatmul.mubr.bf16.gmra.mxu0 %v503
    %v651 = vpop.f32.mrf.mxu0
    %v652 = vadd.f32 0.0, %v651
    %v653 = vpop.f32.mrf.mxu0
    %v654 = vpop.f32.mrf.mxu0
    %v655 = vadd.f32 0.0, %v654
    %v656 = vpop.f32.mrf.mxu0
    %657 = vmatprep.mubr.bf16.mxu0 0
    %658 = vmatmul.mubr.bf16.gmra.mxu0 %v504
    %v659 = vpop.f32.mrf.mxu0
    %v660 = vadd.f32 0.0, %v659
    %v661 = vpop.f32.mrf.mxu0
    %v662 = vpop.f32.mrf.mxu0
    %v663 = vadd.f32 0.0, %v662
    %v664 = vpop.f32.mrf.mxu0
    %665 = vdwg.mxu0
    %v666 = vpack.c.bf16 %v607, %v604
    %v667 = vpack.c.bf16 %v615, %v612
    %v668 = vpack.c.bf16 %v623, %v620
    %v669 = vpack.c.bf16 %v631, %v628
    %v670 = vpack.c.bf16 %v639, %v636
    %v671 = vpack.c.bf16 %v647, %v644
    %v672 = vpack.c.bf16 %v655, %v652
    %v673 = vpack.c.bf16 %v663, %v660
    %v674 = vld [vmem:[%s5] sm:$0x1]
    %v676 = vlaneseq
    %v677 = vshrl.u32 %v676, 7
    %v678 = vsub.s32 0, %v677
    %v679 = vrot.slane %v674, %v678
    %681 = vmatprep.subr.bf16.mxu0 0
    %682 = vmatpush1.bf16.msra.mxu0 %v673
    %683 = vmatprep.subr.bf16.mxu0 0
    %684 = vmatpush1.bf16.msra.mxu0 %v672
    %685 = vmatprep.subr.bf16.mxu0 0
    %686 = vmatpush1.bf16.msra.mxu0 %v671
    %687 = vmatprep.subr.bf16.mxu0 0
    %688 = vmatpush1.bf16.msra.mxu0 %v670
    %689 = vmatprep.subr.bf16.mxu0 0
    %690 = vmatpush1.bf16.msra.mxu0 %v669
    %691 = vmatprep.subr.bf16.mxu0 0
    %692 = vmatpush1.bf16.msra.mxu0 %v668
    %693 = vmatprep.subr.bf16.mxu0 0
    %694 = vmatpush1.bf16.msra.mxu0 %v667
    %695 = vmatprep.subr.bf16.mxu0 0
    %696 = vmatpush1.bf16.msra.mxu0 %v666
    %697 = vmatprep.subr.bf16.mxu0 0
    %698 = vmatpush2.bf16.msra.mxu0 0
    %699 = vmatprep.subr.bf16.mxu0 0
    %700 = vmatpush2.bf16.msra.mxu0 0
    %701 = vmatprep.subr.bf16.mxu0 0
    %702 = vmatpush2.bf16.msra.mxu0 0
    %703 = vmatprep.subr.bf16.mxu0 0
    %704 = vmatpush2.bf16.msra.mxu0 0
    %705 = vmatprep.subr.bf16.mxu0 0
    %706 = vmatpush2.bf16.msra.mxu0 0
    %707 = vmatprep.subr.bf16.mxu0 0
    %708 = vmatpush2.bf16.msra.mxu0 0
    %709 = vmatprep.subr.bf16.mxu0 0
    %710 = vmatpush2.bf16.msra.mxu0 0
    %711 = vmatprep.subr.bf16.mxu0 0
    %712 = vmatpush2.bf16.msra.mxu0 0
    %713 = vmatprep.mubr.bf16.mxu0 0
    %714 = vmatmul.mubr.bf16.gmra.mxu0 %v368
    %v715 = vpop.f32.mrf.mxu0
    %v716 = vadd.f32 %v679, %v715
    %v717 = vpop.f32.mrf.mxu0
    %v718 = vpop.f32.mrf.mxu0
    %v719 = vadd.f32 %v679, %v718
    %v720 = vpop.f32.mrf.mxu0
    %721 = vmatprep.mubr.bf16.mxu0 0
    %722 = vmatmul.mubr.bf16.gmra.mxu0 %v369
    %v723 = vpop.f32.mrf.mxu0
    %v724 = vadd.f32 %v679, %v723
    %v725 = vpop.f32.mrf.mxu0
    %v726 = vpop.f32.mrf.mxu0
    %v727 = vadd.f32 %v679, %v726
    %v728 = vpop.f32.mrf.mxu0
    %729 = vmatprep.mubr.bf16.mxu0 0
    %730 = vmatmul.mubr.bf16.gmra.mxu0 %v370
    %v731 = vpop.f32.mrf.mxu0
    %v732 = vadd.f32 %v679, %v731
    %v733 = vpop.f32.mrf.mxu0
    %v734 = vpop.f32.mrf.mxu0
    %v735 = vadd.f32 %v679, %v734
    %v736 = vpop.f32.mrf.mxu0
    %737 = vmatprep.mubr.bf16.mxu0 0
    %738 = vmatmul.mubr.bf16.gmra.mxu0 %v371
    %v739 = vpop.f32.mrf.mxu0
    %v740 = vadd.f32 %v679, %v739
    %v741 = vpop.f32.mrf.mxu0
    %v742 = vpop.f32.mrf.mxu0
    %v743 = vadd.f32 %v679, %v742
    %v744 = vpop.f32.mrf.mxu0
    %745 = vmatprep.mubr.bf16.mxu0 0
    %746 = vmatmul.mubr.bf16.gmra.mxu0 %v372
    %v747 = vpop.f32.mrf.mxu0
    %v748 = vadd.f32 %v679, %v747
    %v749 = vpop.f32.mrf.mxu0
    %v750 = vpop.f32.mrf.mxu0
    %v751 = vadd.f32 %v679, %v750
    %v752 = vpop.f32.mrf.mxu0
    %753 = vmatprep.mubr.bf16.mxu0 0
    %754 = vmatmul.mubr.bf16.gmra.mxu0 %v373
    %v755 = vpop.f32.mrf.mxu0
    %v756 = vadd.f32 %v679, %v755
    %v757 = vpop.f32.mrf.mxu0
    %v758 = vpop.f32.mrf.mxu0
    %v759 = vadd.f32 %v679, %v758
    %v760 = vpop.f32.mrf.mxu0
    %761 = vmatprep.mubr.bf16.mxu0 0
    %762 = vmatmul.mubr.bf16.gmra.mxu0 %v374
    %v763 = vpop.f32.mrf.mxu0
    %v764 = vadd.f32 %v679, %v763
    %v765 = vpop.f32.mrf.mxu0
    %v766 = vpop.f32.mrf.mxu0
    %v767 = vadd.f32 %v679, %v766
    %v768 = vpop.f32.mrf.mxu0
    %769 = vmatprep.mubr.bf16.mxu0 0
    %770 = vmatmul.mubr.bf16.gmra.mxu0 %v375
    %v771 = vpop.f32.mrf.mxu0
    %v772 = vadd.f32 %v679, %v771
    %v773 = vpop.f32.mrf.mxu0
    %v774 = vpop.f32.mrf.mxu0
    %v775 = vadd.f32 %v679, %v774
    %v776 = vpop.f32.mrf.mxu0
    %777 = vdwg.mxu0
    %v778 = vmax.f32 %v716, 0.0
    %v779 = vmax.f32 %v719, 0.0
    %v780 = vmax.f32 %v724, 0.0
    %v781 = vmax.f32 %v727, 0.0
    %v782 = vmax.f32 %v732, 0.0
    %v783 = vmax.f32 %v735, 0.0
    %v784 = vmax.f32 %v740, 0.0
    %v785 = vmax.f32 %v743, 0.0
    %v786 = vmax.f32 %v748, 0.0
    %v787 = vmax.f32 %v751, 0.0
    %v788 = vmax.f32 %v756, 0.0
    %v789 = vmax.f32 %v759, 0.0
    %v790 = vmax.f32 %v764, 0.0
    %v791 = vmax.f32 %v767, 0.0
    %v792 = vmax.f32 %v772, 0.0
    %v793 = vmax.f32 %v775, 0.0
    %v794 = vpack.c.bf16 %v779, %v778
    %v795 = vpack.c.bf16 %v781, %v780
    %v796 = vpack.c.bf16 %v783, %v782
    %v797 = vpack.c.bf16 %v785, %v784
    %v798 = vpack.c.bf16 %v787, %v786
    %v799 = vpack.c.bf16 %v789, %v788
    %v800 = vpack.c.bf16 %v791, %v790
    %v801 = vpack.c.bf16 %v793, %v792
    %v810 = vunpack.c.l.b16 %v794
    %v811 = vunpack.c.h.b16 %v794
    %v812 = vunpack.c.l.b16 %v795
    %v813 = vunpack.c.h.b16 %v795
    %v814 = vunpack.c.l.b16 %v796
    %v815 = vunpack.c.h.b16 %v796
    %v816 = vunpack.c.l.b16 %v797
    %v817 = vunpack.c.h.b16 %v797
    %v818 = vunpack.c.l.b16 %v798
    %v819 = vunpack.c.h.b16 %v798
    %v820 = vunpack.c.l.b16 %v799
    %v821 = vunpack.c.h.b16 %v799
    %v822 = vunpack.c.l.b16 %v800
    %v823 = vunpack.c.h.b16 %v800
    %v824 = vunpack.c.l.b16 %v801
    %v825 = vunpack.c.h.b16 %v801
    %v826 = vpack.c.b16 %v810, %v810
    %v827 = vpack.c.b16 %v811, %v811
    %v828 = vpack.c.b16 %v812, %v812
    %v829 = vpack.c.b16 %v813, %v813
    %v830 = vpack.c.b16 %v814, %v814
    %v831 = vpack.c.b16 %v815, %v815
    %v832 = vpack.c.b16 %v816, %v816
    %v833 = vpack.c.b16 %v817, %v817
    %v834 = vpack.c.b16 %v818, %v818
    %v835 = vpack.c.b16 %v819, %v819
    %v836 = vpack.c.b16 %v820, %v820
    %v837 = vpack.c.b16 %v821, %v821
    %v838 = vpack.c.b16 %v822, %v822
    %v839 = vpack.c.b16 %v823, %v823
    %v840 = vpack.c.b16 %v824, %v824
    %v841 = vpack.c.b16 %v825, %v825
    %858 = vst [vmem:[#allocation10] sm:$0xf] %v826
    %859 = vst [vmem:[#allocation10 + $0x4] sm:$0xf] %v827
    %860 = vst [vmem:[#allocation10 + $0x8] sm:$0xf] %v828
    %861 = vst [vmem:[#allocation10 + $0xc] sm:$0xf] %v829
    %862 = vst [vmem:[#allocation10 + $0x10] sm:$0xf] %v830
    %863 = vst [vmem:[#allocation10 + $0x14] sm:$0xf] %v831
    %864 = vst [vmem:[#allocation10 + $0x18] sm:$0xf] %v832
    %865 = vst [vmem:[#allocation10 + $0x1c] sm:$0xf] %v833
    %866 = vst [vmem:[#allocation10 + $0x20] sm:$0xf] %v834
    %867 = vst [vmem:[#allocation10 + $0x24] sm:$0xf] %v835
    %868 = vst [vmem:[#allocation10 + $0x28] sm:$0xf] %v836
    %869 = vst [vmem:[#allocation10 + $0x2c] sm:$0xf] %v837
    %870 = vst [vmem:[#allocation10 + $0x30] sm:$0xf] %v838
    %871 = vst [vmem:[#allocation10 + $0x34] sm:$0xf] %v839
    %872 = vst [vmem:[#allocation10 + $0x38] sm:$0xf] %v840
    %873 = vst [vmem:[#allocation10 + $0x3c] sm:$0xf] %v841
    // Predicated region
    $region42: #{tpu_custom_call.1} parent=1 // pred_check
      _
    $region43: #{tpu_custom_call.1} parent=1 // pred_check_branch
      %875 = sbr.rel (0) target = $region45
    $region44: #{tpu_custom_call.1} parent=1 // pred_region
      %s877 = ssub.s32 1024, 1024
      %878 = vsyncadd [#allocation4], %s877
      %s879 = sshll.u32 [#allocation10], 4
      %s880 = int_to_ptr.vmem [resolvable:$true] %s879
      %885 = dma.vmem_to_hbm [thread:$0]  %s880, 1024, %s6, [#allocation4], 64, 64, 4
    $region45: #{tpu_custom_call.1} parent=1 // pred_fallthru
      _
    // Predicated region
    $region46: #{tpu_custom_call.1} parent=1 // pred_check
      _
    $region47: #{tpu_custom_call.1} parent=1 // pred_check_branch
      %887 = sbr.rel (0) target = $region49
    $region48: #{tpu_custom_call.1} parent=1 // pred_region
      %888 = dma.done [#allocation4], 1024
    $region49: #{tpu_custom_call.1} parent=1 // pred_fallthru
      _
    %889 = vsyncpa [#allocation3], 1
    %890 = vsyncpa [#allocation6], 1
    %891 = vsyncpa [#allocation9], 1
    %892 = vsyncpa [#allocation4], 1

// kernel: tpu_custom_call.1
$region0: #{tpu_custom_call.1}
  #allocation0 [shape = 'u32[]', space=smem, size = 0x4, offset = 0x4, fixed_abs, tag = 'smem constant byte address 0x4 - core index']
  #allocation1 [shape = 'u32[144,128]{1,0:T(1,128)}', space=vmem, size = 0x12000, scoped, tag = 'internal scratch']
  %s0 = inlined_call_operand.hbm [shape: bf16[128,128], index: 0, kind: input, shape index: {}]
  %s1 = inlined_call_operand.hbm [shape: bf16[128,128], index: 1, kind: input, shape index: {}]
  %s2 = inlined_call_operand.hbm [shape: bf16[128,128], index: 2, kind: input, shape index: {}]
  %s3 = inlined_call_operand.vmem [shape: f32[1,128], index: 3, kind: input, shape index: {}]
  %s4 = inlined_call_operand.hbm [shape: bf16[128,128], index: 4, kind: input, shape index: {}]
  %s5 = inlined_call_operand.vmem [shape: f32[1,128], index: 5, kind: input, shape index: {}]
  %s6 = inlined_call_operand.hbm [shape: bf16[128,128], index: 6, kind: output, shape index: {}]
  %s7 = sld [smem:[#allocation0]]
  $region50: #{tpu_custom_call.1} parent=0
    _
  %s9 = ssub.s32 1, %s7
  %s10 = scalar_select 0, %s9, %s7
  $region1: #{tpu_custom_call.1} parent=0
    #allocation2 [shape = 'u8[32768]{0}', space=vmem, size = 0x8000, scoped, tag = 'input window, operand 0, single buffered']
    #allocation3 [shape = 's32[1]{0}', space=sflag, size = 0x4, scoped, tag = 'scoped memory for tpu_custom_call.1']
    #allocation4 [shape = 's32[1]{0}', space=sflag, size = 0x4, scoped, tag = 'scoped memory for tpu_custom_call.1']
    #allocation5 [shape = 'u8[32768]{0}', space=vmem, size = 0x8000, scoped, tag = 'input window, operand 1, single buffered']
    #allocation6 [shape = 's32[1]{0}', space=sflag, size = 0x4, scoped, tag = 'scoped memory for tpu_custom_call.1']
    #allocation7 [shape = 'u8[32768]{0}', space=vmem, size = 0x8000, scoped, tag = 'input window, operand 2, single buffered']
    #allocation8 [shape = 'u8[32768]{0}', space=vmem, size = 0x8000, scoped, tag = 'input window, operand 4, single buffered']
    #allocation9 [shape = 's32[1]{0}', space=sflag, size = 0x4, scoped, tag = 'scoped memory for tpu_custom_call.1']
    #allocation10 [shape = 'u8[32768]{0}', space=vmem, size = 0x8000, scoped, tag = 'output window, operand 0, single buffered']
    %11 = vsyncpa [#allocation3], 0
    %12 = vsyncpa [#allocation6], 0
    %13 = vsyncpa [#allocation9], 0
    %14 = vsyncpa [#allocation4], 0
    // Predicated region
    $region2: #{tpu_custom_call.1} parent=1 // pred_check
      _
    $region3: #{tpu_custom_call.1} parent=1 // pred_check_branch
      %16 = sbr.rel (0) target = $region5
    $region4: #{tpu_custom_call.1} parent=1 // pred_region
      %s18 = ssub.s32 1024, 1024
      %19 = vsyncadd [#allocation3], %s18
      %s20 = sshll.u32 [#allocation2], 4
      %s21 = int_to_ptr.vmem [resolvable:$true] %s20
      %26 = dma.hbm_to_vmem [thread:$0]  %s0, 1024, %s21, [#allocation3], 64, 64, 4
    $region5: #{tpu_custom_call.1} parent=1 // pred_fallthru
      _
    // Predicated region
    $region6: #{tpu_custom_call.1} parent=1 // pred_check
      _
    $region7: #{tpu_custom_call.1} parent=1 // pred_check_branch
      %28 = sbr.rel (0) target = $region9
    $region8: #{tpu_custom_call.1} parent=1 // pred_region
      %s30 = ssub.s32 1024, 1024
      %31 = vsyncadd [#allocation6], %s30
      %s32 = sshll.u32 [#allocation5], 4
      %s33 = int_to_ptr.vmem [resolvable:$true] %s32
      %38 = dma.hbm_to_vmem [thread:$0]  %s1, 1024, %s33, [#allocation6], 64, 64, 4
    $region9: #{tpu_custom_call.1} parent=1 // pred_fallthru
      _
    // Predicated region
    $region10: #{tpu_custom_call.1} parent=1 // pred_check
      _
    $region11: #{tpu_custom_call.1} parent=1 // pred_check_branch
      %40 = sbr.rel (0) target = $region13
    $region12: #{tpu_custom_call.1} parent=1 // pred_region
      %s42 = ssub.s32 1024, 1024
      %43 = vsyncadd [#allocation6], %s42
      %s44 = sshll.u32 [#allocation7], 4
      %s45 = int_to_ptr.vmem [resolvable:$true] %s44
      %50 = dma.hbm_to_vmem [thread:$0]  %s2, 1024, %s45, [#allocation6], 64, 64, 4
    $region13: #{tpu_custom_call.1} parent=1 // pred_fallthru
      _
    // Predicated region
    $region14: #{tpu_custom_call.1} parent=1 // pred_check
      _
    $region15: #{tpu_custom_call.1} parent=1 // pred_check_branch
      %52 = sbr.rel (0) target = $region17
    $region16: #{tpu_custom_call.1} parent=1 // pred_region
      _
    $region17: #{tpu_custom_call.1} parent=1 // pred_fallthru
      _
    // Predicated region
    $region18: #{tpu_custom_call.1} parent=1 // pred_check
      _
    $region19: #{tpu_custom_call.1} parent=1 // pred_check_branch
      %54 = sbr.rel (0) target = $region21
    $region20: #{tpu_custom_call.1} parent=1 // pred_region
      %s56 = ssub.s32 1024, 1024
      %57 = vsyncadd [#allocation9], %s56
      %s58 = sshll.u32 [#allocation8], 4
      %s59 = int_to_ptr.vmem [resolvable:$true] %s58
      %64 = dma.hbm_to_vmem [thread:$0]  %s4, 1024, %s59, [#allocation9], 64, 64, 4
    $region21: #{tpu_custom_call.1} parent=1 // pred_fallthru
      _
    // Predicated region
    $region22: #{tpu_custom_call.1} parent=1 // pred_check
      _
    $region23: #{tpu_custom_call.1} parent=1 // pred_check_branch
      %66 = sbr.rel (0) target = $region25
    $region24: #{tpu_custom_call.1} parent=1 // pred_region
      _
    $region25: #{tpu_custom_call.1} parent=1 // pred_fallthru
      _
    // Predicated region
    $region26: #{tpu_custom_call.1} parent=1 // pred_check
      _
    $region27: #{tpu_custom_call.1} parent=1 // pred_check_branch
      %68 = sbr.rel (0) target = $region29
    $region28: #{tpu_custom_call.1} parent=1 // pred_region
      %69 = dma.done [#allocation3], 1024
    $region29: #{tpu_custom_call.1} parent=1 // pred_fallthru
      _
    // Predicated region
    $region30: #{tpu_custom_call.1} parent=1 // pred_check
      _
    $region31: #{tpu_custom_call.1} parent=1 // pred_check_branch
      %71 = sbr.rel (0) target = $region33
    $region32: #{tpu_custom_call.1} parent=1 // pred_region
      %72 = dma.done [#allocation6], 1024
    $region33: #{tpu_custom_call.1} parent=1 // pred_fallthru
      _
    // Predicated region
    $region34: #{tpu_custom_call.1} parent=1 // pred_check
      _
    $region35: #{tpu_custom_call.1} parent=1 // pred_check_branch
      %74 = sbr.rel (0) target = $region37
    $region36: #{tpu_custom_call.1} parent=1 // pred_region
      %75 = dma.done [#allocation6], 1024
    $region37: #{tpu_custom_call.1} parent=1 // pred_fallthru
      _
    // Predicated region
    $region38: #{tpu_custom_call.1} parent=1 // pred_check
      _
    $region39: #{tpu_custom_call.1} parent=1 // pred_check_branch
      %77 = sbr.rel (0) target = $region41
    $region40: #{tpu_custom_call.1} parent=1 // pred_region
      %78 = dma.done [#allocation9], 1024
    $region41: #{tpu_custom_call.1} parent=1 // pred_fallthru
      _
    %v80 = vld [vmem:[#allocation2] sm:$0xf]
    %v81 = vld [vmem:[#allocation2 + $0x4] sm:$0xf]
    %v82 = vld [vmem:[#allocation2 + $0x8] sm:$0xf]
    %v83 = vld [vmem:[#allocation2 + $0xc] sm:$0xf]
    %v84 = vld [vmem:[#allocation2 + $0x10] sm:$0xf]
    %v85 = vld [vmem:[#allocation2 + $0x14] sm:$0xf]
    %v86 = vld [vmem:[#allocation2 + $0x18] sm:$0xf]
    %v87 = vld [vmem:[#allocation2 + $0x1c] sm:$0xf]
    %v88 = vld [vmem:[#allocation2 + $0x20] sm:$0xf]
    %v89 = vld [vmem:[#allocation2 + $0x24] sm:$0xf]
    %v90 = vld [vmem:[#allocation2 + $0x28] sm:$0xf]
    %v91 = vld [vmem:[#allocation2 + $0x2c] sm:$0xf]
    %v92 = vld [vmem:[#allocation2 + $0x30] sm:$0xf]
    %v93 = vld [vmem:[#allocation2 + $0x34] sm:$0xf]
    %v94 = vld [vmem:[#allocation2 + $0x38] sm:$0xf]
    %v95 = vld [vmem:[#allocation2 + $0x3c] sm:$0xf]
    %v96 = vld [vmem:[#allocation5] sm:$0xf]
    %v97 = vld [vmem:[#allocation5 + $0x4] sm:$0xf]
    %v98 = vld [vmem:[#allocation5 + $0x8] sm:$0xf]
    %v99 = vld [vmem:[#allocation5 + $0xc] sm:$0xf]
    %v100 = vld [vmem:[#allocation5 + $0x10] sm:$0xf]
    %v101 = vld [vmem:[#allocation5 + $0x14] sm:$0xf]
    %v102 = vld [vmem:[#allocation5 + $0x18] sm:$0xf]
    %v103 = vld [vmem:[#allocation5 + $0x1c] sm:$0xf]
    %v104 = vld [vmem:[#allocation5 + $0x20] sm:$0xf]
    %v105 = vld [vmem:[#allocation5 + $0x24] sm:$0xf]
    %v106 = vld [vmem:[#allocation5 + $0x28] sm:$0xf]
    %v107 = vld [vmem:[#allocation5 + $0x2c] sm:$0xf]
    %v108 = vld [vmem:[#allocation5 + $0x30] sm:$0xf]
    %v109 = vld [vmem:[#allocation5 + $0x34] sm:$0xf]
    %v110 = vld [vmem:[#allocation5 + $0x38] sm:$0xf]
    %v111 = vld [vmem:[#allocation5 + $0x3c] sm:$0xf]
    %v112 = vld [vmem:[#allocation7] sm:$0xf]
    %v113 = vld [vmem:[#allocation7 + $0x4] sm:$0xf]
    %v114 = vld [vmem:[#allocation7 + $0x8] sm:$0xf]
    %v115 = vld [vmem:[#allocation7 + $0xc] sm:$0xf]
    %v116 = vld [vmem:[#allocation7 + $0x10] sm:$0xf]
    %v117 = vld [vmem:[#allocation7 + $0x14] sm:$0xf]
    %v118 = vld [vmem:[#allocation7 + $0x18] sm:$0xf]
    %v119 = vld [vmem:[#allocation7 + $0x1c] sm:$0xf]
    %v120 = vld [vmem:[#allocation7 + $0x20] sm:$0xf]
    %v121 = vld [vmem:[#allocation7 + $0x24] sm:$0xf]
    %v122 = vld [vmem:[#allocation7 + $0x28] sm:$0xf]
    %v123 = vld [vmem:[#allocation7 + $0x2c] sm:$0xf]
    %v124 = vld [vmem:[#allocation7 + $0x30] sm:$0xf]
    %v125 = vld [vmem:[#allocation7 + $0x34] sm:$0xf]
    %v126 = vld [vmem:[#allocation7 + $0x38] sm:$0xf]
    %v127 = vld [vmem:[#allocation7 + $0x3c] sm:$0xf]
    %v144 = vunpack.c.l.b16 %v96
    %v145 = vunpack.c.l.b16 %v97
    %v146 = vunpack.c.l.b16 %v98
    %v147 = vunpack.c.l.b16 %v99
    %v148 = vunpack.c.l.b16 %v100
    %v149 = vunpack.c.l.b16 %v101
    %v150 = vunpack.c.l.b16 %v102
    %v151 = vunpack.c.l.b16 %v103
    %v152 = vunpack.c.l.b16 %v104
    %v153 = vunpack.c.l.b16 %v105
    %v154 = vunpack.c.l.b16 %v106
    %v155 = vunpack.c.l.b16 %v107
    %v156 = vunpack.c.l.b16 %v108
    %v157 = vunpack.c.l.b16 %v109
    %v158 = vunpack.c.l.b16 %v110
    %v159 = vunpack.c.l.b16 %v111
    %v160 = vpack.c.b16 %v145, %v144
    %v161 = vpack.c.b16 %v147, %v146
    %v162 = vpack.c.b16 %v149, %v148
    %v163 = vpack.c.b16 %v151, %v150
    %v164 = vpack.c.b16 %v153, %v152
    %v165 = vpack.c.b16 %v155, %v154
    %v166 = vpack.c.b16 %v157, %v156
    %v167 = vpack.c.b16 %v159, %v158
    %v192 = vunpack.c.l.b16 %v112
    %v193 = vunpack.c.l.b16 %v113
    %v194 = vunpack.c.l.b16 %v114
    %v195 = vunpack.c.l.b16 %v115
    %v196 = vunpack.c.l.b16 %v116
    %v197 = vunpack.c.l.b16 %v117
    %v198 = vunpack.c.l.b16 %v118
    %v199 = vunpack.c.l.b16 %v119
    %v200 = vunpack.c.l.b16 %v120
    %v201 = vunpack.c.l.b16 %v121
    %v202 = vunpack.c.l.b16 %v122
    %v203 = vunpack.c.l.b16 %v123
    %v204 = vunpack.c.l.b16 %v124
    %v205 = vunpack.c.l.b16 %v125
    %v206 = vunpack.c.l.b16 %v126
    %v207 = vunpack.c.l.b16 %v127
    %v208 = vpack.c.b16 %v193, %v192
    %v209 = vpack.c.b16 %v195, %v194
    %v210 = vpack.c.b16 %v197, %v196
    %v211 = vpack.c.b16 %v199, %v198
    %v212 = vpack.c.b16 %v201, %v200
    %v213 = vpack.c.b16 %v203, %v202
    %v214 = vpack.c.b16 %v205, %v204
    %v215 = vpack.c.b16 %v207, %v206
    %224 = vmatprep.subr.bf16.mxu0 0
    %225 = vmatpush1.bf16.msra.mxu0 %v215
    %226 = vmatprep.subr.bf16.mxu0 0
    %227 = vmatpush1.bf16.msra.mxu0 %v214
    %228 = vmatprep.subr.bf16.mxu0 0
    %229 = vmatpush1.bf16.msra.mxu0 %v213
    %230 = vmatprep.subr.bf16.mxu0 0
    %231 = vmatpush1.bf16.msra.mxu0 %v212
    %232 = vmatprep.subr.bf16.mxu0 0
    %233 = vmatpush1.bf16.msra.mxu0 %v211
    %234 = vmatprep.subr.bf16.mxu0 0
    %235 = vmatpush1.bf16.msra.mxu0 %v210
    %236 = vmatprep.subr.bf16.mxu0 0
    %237 = vmatpush1.bf16.msra.mxu0 %v209
    %238 = vmatprep.subr.bf16.mxu0 0
    %239 = vmatpush1.bf16.msra.mxu0 %v208
    %240 = vmatprep.subr.bf16.mxu0 0
    %241 = vmatpush2.bf16.msra.mxu0 0
    %242 = vmatprep.subr.bf16.mxu0 0
    %243 = vmatpush2.bf16.msra.mxu0 0
    %244 = vmatprep.subr.bf16.mxu0 0
    %245 = vmatpush2.bf16.msra.mxu0 0
    %246 = vmatprep.subr.bf16.mxu0 0
    %247 = vmatpush2.bf16.msra.mxu0 0
    %248 = vmatprep.subr.bf16.mxu0 0
    %249 = vmatpush2.bf16.msra.mxu0 0
    %250 = vmatprep.subr.bf16.mxu0 0
    %251 = vmatpush2.bf16.msra.mxu0 0
    %252 = vmatprep.subr.bf16.mxu0 0
    %253 = vmatpush2.bf16.msra.mxu0 0
    %254 = vmatprep.subr.bf16.mxu0 0
    %255 = vmatpush2.bf16.msra.mxu0 0
    %256 = vmatprep.mubr.bf16.mxu0 0
    %257 = vmatmul.mubr.bf16.gmra.mxu0 %v160
    %v258 = vpop.f32.mrf.mxu0
    %v259 = vadd.f32 0.0, %v258
    %v260 = vpop.f32.mrf.mxu0
    %v261 = vpop.f32.mrf.mxu0
    %v262 = vadd.f32 0.0, %v261
    %v263 = vpop.f32.mrf.mxu0
    %264 = vmatprep.mubr.bf16.mxu0 0
    %265 = vmatmul.mubr.bf16.gmra.mxu0 %v161
    %v266 = vpop.f32.mrf.mxu0
    %v267 = vadd.f32 0.0, %v266
    %v268 = vpop.f32.mrf.mxu0
    %v269 = vpop.f32.mrf.mxu0
    %v270 = vadd.f32 0.0, %v269
    %v271 = vpop.f32.mrf.mxu0
    %272 = vmatprep.mubr.bf16.mxu0 0
    %273 = vmatmul.mubr.bf16.gmra.mxu0 %v162
    %v274 = vpop.f32.mrf.mxu0
    %v275 = vadd.f32 0.0, %v274
    %v276 = vpop.f32.mrf.mxu0
    %v277 = vpop.f32.mrf.mxu0
    %v278 = vadd.f32 0.0, %v277
    %v279 = vpop.f32.mrf.mxu0
    %280 = vmatprep.mubr.bf16.mxu0 0
    %281 = vmatmul.mubr.bf16.gmra.mxu0 %v163
    %v282 = vpop.f32.mrf.mxu0
    %v283 = vadd.f32 0.0, %v282
    %v284 = vpop.f32.mrf.mxu0
    %v285 = vpop.f32.mrf.mxu0
    %v286 = vadd.f32 0.0, %v285
    %v287 = vpop.f32.mrf.mxu0
    %288 = vmatprep.mubr.bf16.mxu0 0
    %289 = vmatmul.mubr.bf16.gmra.mxu0 %v164
    %v290 = vpop.f32.mrf.mxu0
    %v291 = vadd.f32 0.0, %v290
    %v292 = vpop.f32.mrf.mxu0
    %v293 = vpop.f32.mrf.mxu0
    %v294 = vadd.f32 0.0, %v293
    %v295 = vpop.f32.mrf.mxu0
    %296 = vmatprep.mubr.bf16.mxu0 0
    %297 = vmatmul.mubr.bf16.gmra.mxu0 %v165
    %v298 = vpop.f32.mrf.mxu0
    %v299 = vadd.f32 0.0, %v298
    %v300 = vpop.f32.mrf.mxu0
    %v301 = vpop.f32.mrf.mxu0
    %v302 = vadd.f32 0.0, %v301
    %v303 = vpop.f32.mrf.mxu0
    %304 = vmatprep.mubr.bf16.mxu0 0
    %305 = vmatmul.mubr.bf16.gmra.mxu0 %v166
    %v306 = vpop.f32.mrf.mxu0
    %v307 = vadd.f32 0.0, %v306
    %v308 = vpop.f32.mrf.mxu0
    %v309 = vpop.f32.mrf.mxu0
    %v310 = vadd.f32 0.0, %v309
    %v311 = vpop.f32.mrf.mxu0
    %312 = vmatprep.mubr.bf16.mxu0 0
    %313 = vmatmul.mubr.bf16.gmra.mxu0 %v167
    %v314 = vpop.f32.mrf.mxu0
    %v315 = vadd.f32 0.0, %v314
    %v316 = vpop.f32.mrf.mxu0
    %v317 = vpop.f32.mrf.mxu0
    %v318 = vadd.f32 0.0, %v317
    %v319 = vpop.f32.mrf.mxu0
    %320 = vdwg.mxu0
    %v321 = vpack.c.bf16 %v262, %v259
    %v322 = vpack.c.bf16 %v270, %v267
    %v323 = vpack.c.bf16 %v278, %v275
    %v324 = vpack.c.bf16 %v286, %v283
    %v325 = vpack.c.bf16 %v294, %v291
    %v326 = vpack.c.bf16 %v302, %v299
    %v327 = vpack.c.bf16 %v310, %v307
    %v328 = vpack.c.bf16 %v318, %v315
    %v329 = vld [vmem:[%s3] sm:$0x1]
    %v331 = vlaneseq
    %v332 = vshrl.u32 %v331, 7
    %v333 = vsub.s32 0, %v332
    %v334 = vrot.slane %v329, %v333
    %v352 = vunpack.c.l.b16 %v80
    %v353 = vunpack.c.l.b16 %v81
    %v354 = vunpack.c.l.b16 %v82
    %v355 = vunpack.c.l.b16 %v83
    %v356 = vunpack.c.l.b16 %v84
    %v357 = vunpack.c.l.b16 %v85
    %v358 = vunpack.c.l.b16 %v86
    %v359 = vunpack.c.l.b16 %v87
    %v360 = vunpack.c.l.b16 %v88
    %v361 = vunpack.c.l.b16 %v89
    %v362 = vunpack.c.l.b16 %v90
    %v363 = vunpack.c.l.b16 %v91
    %v364 = vunpack.c.l.b16 %v92
    %v365 = vunpack.c.l.b16 %v93
    %v366 = vunpack.c.l.b16 %v94
    %v367 = vunpack.c.l.b16 %v95
    %v368 = vpack.c.b16 %v353, %v352
    %v369 = vpack.c.b16 %v355, %v354
    %v370 = vpack.c.b16 %v357, %v356
    %v371 = vpack.c.b16 %v359, %v358
    %v372 = vpack.c.b16 %v361, %v360
    %v373 = vpack.c.b16 %v363, %v362
    %v374 = vpack.c.b16 %v365, %v364
    %v375 = vpack.c.b16 %v367, %v366
    %384 = vmatprep.subr.bf16.mxu0 0
    %385 = vmatpush1.bf16.msra.mxu0 %v328
    %386 = vmatprep.subr.bf16.mxu0 0
    %387 = vmatpush1.bf16.msra.mxu0 %v327
    %388 = vmatprep.subr.bf16.mxu0 0
    %389 = vmatpush1.bf16.msra.mxu0 %v326
    %390 = vmatprep.subr.bf16.mxu0 0
    %391 = vmatpush1.bf16.msra.mxu0 %v325
    %392 = vmatprep.subr.bf16.mxu0 0
    %393 = vmatpush1.bf16.msra.mxu0 %v324
    %394 = vmatprep.subr.bf16.mxu0 0
    %395 = vmatpush1.bf16.msra.mxu0 %v323
    %396 = vmatprep.subr.bf16.mxu0 0
    %397 = vmatpush1.bf16.msra.mxu0 %v322
    %398 = vmatprep.subr.bf16.mxu0 0
    %399 = vmatpush1.bf16.msra.mxu0 %v321
    %400 = vmatprep.subr.bf16.mxu0 0
    %401 = vmatpush2.bf16.msra.mxu0 0
    %402 = vmatprep.subr.bf16.mxu0 0
    %403 = vmatpush2.bf16.msra.mxu0 0
    %404 = vmatprep.subr.bf16.mxu0 0
    %405 = vmatpush2.bf16.msra.mxu0 0
    %406 = vmatprep.subr.bf16.mxu0 0
    %407 = vmatpush2.bf16.msra.mxu0 0
    %408 = vmatprep.subr.bf16.mxu0 0
    %409 = vmatpush2.bf16.msra.mxu0 0
    %410 = vmatprep.subr.bf16.mxu0 0
    %411 = vmatpush2.bf16.msra.mxu0 0
    %412 = vmatprep.subr.bf16.mxu0 0
    %413 = vmatpush2.bf16.msra.mxu0 0
    %414 = vmatprep.subr.bf16.mxu0 0
    %415 = vmatpush2.bf16.msra.mxu0 0
    %416 = vmatprep.mubr.bf16.mxu0 0
    %417 = vmatmul.mubr.bf16.gmra.mxu0 %v368
    %v418 = vpop.f32.mrf.mxu0
    %v419 = vadd.f32 %v334, %v418
    %v420 = vpop.f32.mrf.mxu0
    %v421 = vpop.f32.mrf.mxu0
    %v422 = vadd.f32 %v334, %v421
    %v423 = vpop.f32.mrf.mxu0
    %424 = vmatprep.mubr.bf16.mxu0 0
    %425 = vmatmul.mubr.bf16.gmra.mxu0 %v369
    %v426 = vpop.f32.mrf.mxu0
    %v427 = vadd.f32 %v334, %v426
    %v428 = vpop.f32.mrf.mxu0
    %v429 = vpop.f32.mrf.mxu0
    %v430 = vadd.f32 %v334, %v429
    %v431 = vpop.f32.mrf.mxu0
    %432 = vmatprep.mubr.bf16.mxu0 0
    %433 = vmatmul.mubr.bf16.gmra.mxu0 %v370
    %v434 = vpop.f32.mrf.mxu0
    %v435 = vadd.f32 %v334, %v434
    %v436 = vpop.f32.mrf.mxu0
    %v437 = vpop.f32.mrf.mxu0
    %v438 = vadd.f32 %v334, %v437
    %v439 = vpop.f32.mrf.mxu0
    %440 = vmatprep.mubr.bf16.mxu0 0
    %441 = vmatmul.mubr.bf16.gmra.mxu0 %v371
    %v442 = vpop.f32.mrf.mxu0
    %v443 = vadd.f32 %v334, %v442
    %v444 = vpop.f32.mrf.mxu0
    %v445 = vpop.f32.mrf.mxu0
    %v446 = vadd.f32 %v334, %v445
    %v447 = vpop.f32.mrf.mxu0
    %448 = vmatprep.mubr.bf16.mxu0 0
    %449 = vmatmul.mubr.bf16.gmra.mxu0 %v372
    %v450 = vpop.f32.mrf.mxu0
    %v451 = vadd.f32 %v334, %v450
    %v452 = vpop.f32.mrf.mxu0
    %v453 = vpop.f32.mrf.mxu0
    %v454 = vadd.f32 %v334, %v453
    %v455 = vpop.f32.mrf.mxu0
    %456 = vmatprep.mubr.bf16.mxu0 0
    %457 = vmatmul.mubr.bf16.gmra.mxu0 %v373
    %v458 = vpop.f32.mrf.mxu0
    %v459 = vadd.f32 %v334, %v458
    %v460 = vpop.f32.mrf.mxu0
    %v461 = vpop.f32.mrf.mxu0
    %v462 = vadd.f32 %v334, %v461
    %v463 = vpop.f32.mrf.mxu0
    %464 = vmatprep.mubr.bf16.mxu0 0
    %465 = vmatmul.mubr.bf16.gmra.mxu0 %v374
    %v466 = vpop.f32.mrf.mxu0
    %v467 = vadd.f32 %v334, %v466
    %v468 = vpop.f32.mrf.mxu0
    %v469 = vpop.f32.mrf.mxu0
    %v470 = vadd.f32 %v334, %v469
    %v471 = vpop.f32.mrf.mxu0
    %472 = vmatprep.mubr.bf16.mxu0 0
    %473 = vmatmul.mubr.bf16.gmra.mxu0 %v375
    %v474 = vpop.f32.mrf.mxu0
    %v475 = vadd.f32 %v334, %v474
    %v476 = vpop.f32.mrf.mxu0
    %v477 = vpop.f32.mrf.mxu0
    %v478 = vadd.f32 %v334, %v477
    %v479 = vpop.f32.mrf.mxu0
    %480 = vdwg.mxu0
    %v481 = vmax.f32 %v419, 0.0
    %v482 = vmax.f32 %v422, 0.0
    %v483 = vmax.f32 %v427, 0.0
    %v484 = vmax.f32 %v430, 0.0
    %v485 = vmax.f32 %v435, 0.0
    %v486 = vmax.f32 %v438, 0.0
    %v487 = vmax.f32 %v443, 0.0
    %v488 = vmax.f32 %v446, 0.0
    %v489 = vmax.f32 %v451, 0.0
    %v490 = vmax.f32 %v454, 0.0
    %v491 = vmax.f32 %v459, 0.0
    %v492 = vmax.f32 %v462, 0.0
    %v493 = vmax.f32 %v467, 0.0
    %v494 = vmax.f32 %v470, 0.0
    %v495 = vmax.f32 %v475, 0.0
    %v496 = vmax.f32 %v478, 0.0
    %v497 = vpack.c.bf16 %v482, %v481
    %v498 = vpack.c.bf16 %v484, %v483
    %v499 = vpack.c.bf16 %v486, %v485
    %v500 = vpack.c.bf16 %v488, %v487
    %v501 = vpack.c.bf16 %v490, %v489
    %v502 = vpack.c.bf16 %v492, %v491
    %v503 = vpack.c.bf16 %v494, %v493
    %v504 = vpack.c.bf16 %v496, %v495
    %v505 = vld [vmem:[#allocation8] sm:$0xf]
    %v506 = vld [vmem:[#allocation8 + $0x4] sm:$0xf]
    %v507 = vld [vmem:[#allocation8 + $0x8] sm:$0xf]
    %v508 = vld [vmem:[#allocation8 + $0xc] sm:$0xf]
    %v509 = vld [vmem:[#allocation8 + $0x10] sm:$0xf]
    %v510 = vld [vmem:[#allocation8 + $0x14] sm:$0xf]
    %v511 = vld [vmem:[#allocation8 + $0x18] sm:$0xf]
    %v512 = vld [vmem:[#allocation8 + $0x1c] sm:$0xf]
    %v513 = vld [vmem:[#allocation8 + $0x20] sm:$0xf]
    %v514 = vld [vmem:[#allocation8 + $0x24] sm:$0xf]
    %v515 = vld [vmem:[#allocation8 + $0x28] sm:$0xf]
    %v516 = vld [vmem:[#allocation8 + $0x2c] sm:$0xf]
    %v517 = vld [vmem:[#allocation8 + $0x30] sm:$0xf]
    %v518 = vld [vmem:[#allocation8 + $0x34] sm:$0xf]
    %v519 = vld [vmem:[#allocation8 + $0x38] sm:$0xf]
    %v520 = vld [vmem:[#allocation8 + $0x3c] sm:$0xf]
    %v537 = vunpack.c.l.b16 %v505
    %v538 = vunpack.c.l.b16 %v506
    %v539 = vunpack.c.l.b16 %v507
    %v540 = vunpack.c.l.b16 %v508
    %v541 = vunpack.c.l.b16 %v509
    %v542 = vunpack.c.l.b16 %v510
    %v543 = vunpack.c.l.b16 %v511
    %v544 = vunpack.c.l.b16 %v512
    %v545 = vunpack.c.l.b16 %v513
    %v546 = vunpack.c.l.b16 %v514
    %v547 = vunpack.c.l.b16 %v515
    %v548 = vunpack.c.l.b16 %v516
    %v549 = vunpack.c.l.b16 %v517
    %v550 = vunpack.c.l.b16 %v518
    %v551 = vunpack.c.l.b16 %v519
    %v552 = vunpack.c.l.b16 %v520
    %v553 = vpack.c.b16 %v538, %v537
    %v554 = vpack.c.b16 %v540, %v539
    %v555 = vpack.c.b16 %v542, %v541
    %v556 = vpack.c.b16 %v544, %v543
    %v557 = vpack.c.b16 %v546, %v545
    %v558 = vpack.c.b16 %v548, %v547
    %v559 = vpack.c.b16 %v550, %v549
    %v560 = vpack.c.b16 %v552, %v551
    %569 = vmatprep.subr.bf16.mxu0 0
    %570 = vmatpush1.bf16.msra.mxu0 %v560
    %571 = vmatprep.subr.bf16.mxu0 0
    %572 = vmatpush1.bf16.msra.mxu0 %v559
    %573 = vmatprep.subr.bf16.mxu0 0
    %574 = vmatpush1.bf16.msra.mxu0 %v558
    %575 = vmatprep.subr.bf16.mxu0 0
    %576 = vmatpush1.bf16.msra.mxu0 %v557
    %577 = vmatprep.subr.bf16.mxu0 0
    %578 = vmatpush1.bf16.msra.mxu0 %v556
    %579 = vmatprep.subr.bf16.mxu0 0
    %580 = vmatpush1.bf16.msra.mxu0 %v555
    %581 = vmatprep.subr.bf16.mxu0 0
    %582 = vmatpush1.bf16.msra.mxu0 %v554
    %583 = vmatprep.subr.bf16.mxu0 0
    %584 = vmatpush1.bf16.msra.mxu0 %v553
    %585 = vmatprep.subr.bf16.mxu0 0
    %586 = vmatpush2.bf16.msra.mxu0 0
    %587 = vmatprep.subr.bf16.mxu0 0
    %588 = vmatpush2.bf16.msra.mxu0 0
    %589 = vmatprep.subr.bf16.mxu0 0
    %590 = vmatpush2.bf16.msra.mxu0 0
    %591 = vmatprep.subr.bf16.mxu0 0
    %592 = vmatpush2.bf16.msra.mxu0 0
    %593 = vmatprep.subr.bf16.mxu0 0
    %594 = vmatpush2.bf16.msra.mxu0 0
    %595 = vmatprep.subr.bf16.mxu0 0
    %596 = vmatpush2.bf16.msra.mxu0 0
    %597 = vmatprep.subr.bf16.mxu0 0
    %598 = vmatpush2.bf16.msra.mxu0 0
    %599 = vmatprep.subr.bf16.mxu0 0
    %600 = vmatpush2.bf16.msra.mxu0 0
    %601 = vmatprep.mubr.bf16.mxu0 0
    %602 = vmatmul.mubr.bf16.gmra.mxu0 %v497
    %v603 = vpop.f32.mrf.mxu0
    %v604 = vadd.f32 0.0, %v603
    %v605 = vpop.f32.mrf.mxu0
    %v606 = vpop.f32.mrf.mxu0
    %v607 = vadd.f32 0.0, %v606
    %v608 = vpop.f32.mrf.mxu0
    %609 = vmatprep.mubr.bf16.mxu0 0
    %610 = vmatmul.mubr.bf16.gmra.mxu0 %v498
    %v611 = vpop.f32.mrf.mxu0
    %v612 = vadd.f32 0.0, %v611
    %v613 = vpop.f32.mrf.mxu0
    %v614 = vpop.f32.mrf.mxu0
    %v615 = vadd.f32 0.0, %v614
    %v616 = vpop.f32.mrf.mxu0
    %617 = vmatprep.mubr.bf16.mxu0 0
    %618 = vmatmul.mubr.bf16.gmra.mxu0 %v499
    %v619 = vpop.f32.mrf.mxu0
    %v620 = vadd.f32 0.0, %v619
    %v621 = vpop.f32.mrf.mxu0
    %v622 = vpop.f32.mrf.mxu0
    %v623 = vadd.f32 0.0, %v622
    %v624 = vpop.f32.mrf.mxu0
    %625 = vmatprep.mubr.bf16.mxu0 0
    %626 = vmatmul.mubr.bf16.gmra.mxu0 %v500
    %v627 = vpop.f32.mrf.mxu0
    %v628 = vadd.f32 0.0, %v627
    %v629 = vpop.f32.mrf.mxu0
    %v630 = vpop.f32.mrf.mxu0
    %v631 = vadd.f32 0.0, %v630
    %v632 = vpop.f32.mrf.mxu0
    %633 = vmatprep.mubr.bf16.mxu0 0
    %634 = vmatmul.mubr.bf16.gmra.mxu0 %v501
    %v635 = vpop.f32.mrf.mxu0
    %v636 = vadd.f32 0.0, %v635
    %v637 = vpop.f32.mrf.mxu0
    %v638 = vpop.f32.mrf.mxu0
    %v639 = vadd.f32 0.0, %v638
    %v640 = vpop.f32.mrf.mxu0
    %641 = vmatprep.mubr.bf16.mxu0 0
    %642 = vmatmul.mubr.bf16.gmra.mxu0 %v502
    %v643 = vpop.f32.mrf.mxu0
    %v644 = vadd.f32 0.0, %v643
    %v645 = vpop.f32.mrf.mxu0
    %v646 = vpop.f32.mrf.mxu0
    %v647 = vadd.f32 0.0, %v646
    %v648 = vpop.f32.mrf.mxu0
    %649 = vmatprep.mubr.bf16.mxu0 0
    %650 = vmatmul.mubr.bf16.gmra.mxu0 %v503
    %v651 = vpop.f32.mrf.mxu0
    %v652 = vadd.f32 0.0, %v651
    %v653 = vpop.f32.mrf.mxu0
    %v654 = vpop.f32.mrf.mxu0
    %v655 = vadd.f32 0.0, %v654
    %v656 = vpop.f32.mrf.mxu0
    %657 = vmatprep.mubr.bf16.mxu0 0
    %658 = vmatmul.mubr.bf16.gmra.mxu0 %v504
    %v659 = vpop.f32.mrf.mxu0
    %v660 = vadd.f32 0.0, %v659
    %v661 = vpop.f32.mrf.mxu0
    %v662 = vpop.f32.mrf.mxu0
    %v663 = vadd.f32 0.0, %v662
    %v664 = vpop.f32.mrf.mxu0
    %665 = vdwg.mxu0
    %v666 = vpack.c.bf16 %v607, %v604
    %v667 = vpack.c.bf16 %v615, %v612
    %v668 = vpack.c.bf16 %v623, %v620
    %v669 = vpack.c.bf16 %v631, %v628
    %v670 = vpack.c.bf16 %v639, %v636
    %v671 = vpack.c.bf16 %v647, %v644
    %v672 = vpack.c.bf16 %v655, %v652
    %v673 = vpack.c.bf16 %v663, %v660
    %v674 = vld [vmem:[%s5] sm:$0x1]
    %v676 = vlaneseq
    %v677 = vshrl.u32 %v676, 7
    %v678 = vsub.s32 0, %v677
    %v679 = vrot.slane %v674, %v678
    %681 = vmatprep.subr.bf16.mxu0 0
    %682 = vmatpush1.bf16.msra.mxu0 %v673
    %683 = vmatprep.subr.bf16.mxu0 0
    %684 = vmatpush1.bf16.msra.mxu0 %v672
    %685 = vmatprep.subr.bf16.mxu0 0
    %686 = vmatpush1.bf16.msra.mxu0 %v671
    %687 = vmatprep.subr.bf16.mxu0 0
    %688 = vmatpush1.bf16.msra.mxu0 %v670
    %689 = vmatprep.subr.bf16.mxu0 0
    %690 = vmatpush1.bf16.msra.mxu0 %v669
    %691 = vmatprep.subr.bf16.mxu0 0
    %692 = vmatpush1.bf16.msra.mxu0 %v668
    %693 = vmatprep.subr.bf16.mxu0 0
    %694 = vmatpush1.bf16.msra.mxu0 %v667
    %695 = vmatprep.subr.bf16.mxu0 0
    %696 = vmatpush1.bf16.msra.mxu0 %v666
    %697 = vmatprep.subr.bf16.mxu0 0
    %698 = vmatpush2.bf16.msra.mxu0 0
    %699 = vmatprep.subr.bf16.mxu0 0
    %700 = vmatpush2.bf16.msra.mxu0 0
    %701 = vmatprep.subr.bf16.mxu0 0
    %702 = vmatpush2.bf16.msra.mxu0 0
    %703 = vmatprep.subr.bf16.mxu0 0
    %704 = vmatpush2.bf16.msra.mxu0 0
    %705 = vmatprep.subr.bf16.mxu0 0
    %706 = vmatpush2.bf16.msra.mxu0 0
    %707 = vmatprep.subr.bf16.mxu0 0
    %708 = vmatpush2.bf16.msra.mxu0 0
    %709 = vmatprep.subr.bf16.mxu0 0
    %710 = vmatpush2.bf16.msra.mxu0 0
    %711 = vmatprep.subr.bf16.mxu0 0
    %712 = vmatpush2.bf16.msra.mxu0 0
    %713 = vmatprep.mubr.bf16.mxu0 0
    %714 = vmatmul.mubr.bf16.gmra.mxu0 %v368
    %v715 = vpop.f32.mrf.mxu0
    %v716 = vadd.f32 %v679, %v715
    %v717 = vpop.f32.mrf.mxu0
    %v718 = vpop.f32.mrf.mxu0
    %v719 = vadd.f32 %v679, %v718
    %v720 = vpop.f32.mrf.mxu0
    %721 = vmatprep.mubr.bf16.mxu0 0
    %722 = vmatmul.mubr.bf16.gmra.mxu0 %v369
    %v723 = vpop.f32.mrf.mxu0
    %v724 = vadd.f32 %v679, %v723
    %v725 = vpop.f32.mrf.mxu0
    %v726 = vpop.f32.mrf.mxu0
    %v727 = vadd.f32 %v679, %v726
    %v728 = vpop.f32.mrf.mxu0
    %729 = vmatprep.mubr.bf16.mxu0 0
    %730 = vmatmul.mubr.bf16.gmra.mxu0 %v370
    %v731 = vpop.f32.mrf.mxu0
    %v732 = vadd.f32 %v679, %v731
    %v733 = vpop.f32.mrf.mxu0
    %v734 = vpop.f32.mrf.mxu0
    %v735 = vadd.f32 %v679, %v734
    %v736 = vpop.f32.mrf.mxu0
    %737 = vmatprep.mubr.bf16.mxu0 0
    %738 = vmatmul.mubr.bf16.gmra.mxu0 %v371
    %v739 = vpop.f32.mrf.mxu0
    %v740 = vadd.f32 %v679, %v739
    %v741 = vpop.f32.mrf.mxu0
    %v742 = vpop.f32.mrf.mxu0
    %v743 = vadd.f32 %v679, %v742
    %v744 = vpop.f32.mrf.mxu0
    %745 = vmatprep.mubr.bf16.mxu0 0
    %746 = vmatmul.mubr.bf16.gmra.mxu0 %v372
    %v747 = vpop.f32.mrf.mxu0
    %v748 = vadd.f32 %v679, %v747
    %v749 = vpop.f32.mrf.mxu0
    %v750 = vpop.f32.mrf.mxu0
    %v751 = vadd.f32 %v679, %v750
    %v752 = vpop.f32.mrf.mxu0
    %753 = vmatprep.mubr.bf16.mxu0 0
    %754 = vmatmul.mubr.bf16.gmra.mxu0 %v373
    %v755 = vpop.f32.mrf.mxu0
    %v756 = vadd.f32 %v679, %v755
    %v757 = vpop.f32.mrf.mxu0
    %v758 = vpop.f32.mrf.mxu0
    %v759 = vadd.f32 %v679, %v758
    %v760 = vpop.f32.mrf.mxu0
    %761 = vmatprep.mubr.bf16.mxu0 0
    %762 = vmatmul.mubr.bf16.gmra.mxu0 %v374
    %v763 = vpop.f32.mrf.mxu0
    %v764 = vadd.f32 %v679, %v763
    %v765 = vpop.f32.mrf.mxu0
    %v766 = vpop.f32.mrf.mxu0
    %v767 = vadd.f32 %v679, %v766
    %v768 = vpop.f32.mrf.mxu0
    %769 = vmatprep.mubr.bf16.mxu0 0
    %770 = vmatmul.mubr.bf16.gmra.mxu0 %v375
    %v771 = vpop.f32.mrf.mxu0
    %v772 = vadd.f32 %v679, %v771
    %v773 = vpop.f32.mrf.mxu0
    %v774 = vpop.f32.mrf.mxu0
    %v775 = vadd.f32 %v679, %v774
    %v776 = vpop.f32.mrf.mxu0
    %777 = vdwg.mxu0
    %v778 = vmax.f32 %v716, 0.0
    %v779 = vmax.f32 %v719, 0.0
    %v780 = vmax.f32 %v724, 0.0
    %v781 = vmax.f32 %v727, 0.0
    %v782 = vmax.f32 %v732, 0.0
    %v783 = vmax.f32 %v735, 0.0
    %v784 = vmax.f32 %v740, 0.0
    %v785 = vmax.f32 %v743, 0.0
    %v786 = vmax.f32 %v748, 0.0
    %v787 = vmax.f32 %v751, 0.0
    %v788 = vmax.f32 %v756, 0.0
    %v789 = vmax.f32 %v759, 0.0
    %v790 = vmax.f32 %v764, 0.0
    %v791 = vmax.f32 %v767, 0.0
    %v792 = vmax.f32 %v772, 0.0
    %v793 = vmax.f32 %v775, 0.0
    %v794 = vpack.c.bf16 %v779, %v778
    %v795 = vpack.c.bf16 %v781, %v780
    %v796 = vpack.c.bf16 %v783, %v782
    %v797 = vpack.c.bf16 %v785, %v784
    %v798 = vpack.c.bf16 %v787, %v786
    %v799 = vpack.c.bf16 %v789, %v788
    %v800 = vpack.c.bf16 %v791, %v790
    %v801 = vpack.c.bf16 %v793, %v792
    %v810 = vunpack.c.l.b16 %v794
    %v811 = vunpack.c.h.b16 %v794
    %v812 = vunpack.c.l.b16 %v795
    %v813 = vunpack.c.h.b16 %v795
    %v814 = vunpack.c.l.b16 %v796
    %v815 = vunpack.c.h.b16 %v796
    %v816 = vunpack.c.l.b16 %v797
    %v817 = vunpack.c.h.b16 %v797
    %v818 = vunpack.c.l.b16 %v798
    %v819 = vunpack.c.h.b16 %v798
    %v820 = vunpack.c.l.b16 %v799
    %v821 = vunpack.c.h.b16 %v799
    %v822 = vunpack.c.l.b16 %v800
    %v823 = vunpack.c.h.b16 %v800
    %v824 = vunpack.c.l.b16 %v801
    %v825 = vunpack.c.h.b16 %v801
    %v826 = vpack.c.b16 %v810, %v810
    %v827 = vpack.c.b16 %v811, %v811
    %v828 = vpack.c.b16 %v812, %v812
    %v829 = vpack.c.b16 %v813, %v813
    %v830 = vpack.c.b16 %v814, %v814
    %v831 = vpack.c.b16 %v815, %v815
    %v832 = vpack.c.b16 %v816, %v816
    %v833 = vpack.c.b16 %v817, %v817
    %v834 = vpack.c.b16 %v818, %v818
    %v835 = vpack.c.b16 %v819, %v819
    %v836 = vpack.c.b16 %v820, %v820
    %v837 = vpack.c.b16 %v821, %v821
    %v838 = vpack.c.b16 %v822, %v822
    %v839 = vpack.c.b16 %v823, %v823
    %v840 = vpack.c.b16 %v824, %v824
    %v841 = vpack.c.b16 %v825, %v825
    %858 = vst [vmem:[#allocation10] sm:$0xf] %v826
    %859 = vst [vmem:[#allocation10 + $0x4] sm:$0xf] %v827
    %860 = vst [vmem:[#allocation10 + $0x8] sm:$0xf] %v828
    %861 = vst [vmem:[#allocation10 + $0xc] sm:$0xf] %v829
    %862 = vst [vmem:[#allocation10 + $0x10] sm:$0xf] %v830
    %863 = vst [vmem:[#allocation10 + $0x14] sm:$0xf] %v831
    %864 = vst [vmem:[#allocation10 + $0x18] sm:$0xf] %v832
    %865 = vst [vmem:[#allocation10 + $0x1c] sm:$0xf] %v833
    %866 = vst [vmem:[#allocation10 + $0x20] sm:$0xf] %v834
    %867 = vst [vmem:[#allocation10 + $0x24] sm:$0xf] %v835
    %868 = vst [vmem:[#allocation10 + $0x28] sm:$0xf] %v836
    %869 = vst [vmem:[#allocation10 + $0x2c] sm:$0xf] %v837
    %870 = vst [vmem:[#allocation10 + $0x30] sm:$0xf] %v838
    %871 = vst [vmem:[#allocation10 + $0x34] sm:$0xf] %v839
    %872 = vst [vmem:[#allocation10 + $0x38] sm:$0xf] %v840
    %873 = vst [vmem:[#allocation10 + $0x3c] sm:$0xf] %v841
    // Predicated region
    $region42: #{tpu_custom_call.1} parent=1 // pred_check
      _
    $region43: #{tpu_custom_call.1} parent=1 // pred_check_branch
      %875 = sbr.rel (0) target = $region45
    $region44: #{tpu_custom_call.1} parent=1 // pred_region
      %s877 = ssub.s32 1024, 1024
      %878 = vsyncadd [#allocation4], %s877
      %s879 = sshll.u32 [#allocation10], 4
      %s880 = int_to_ptr.vmem [resolvable:$true] %s879
      %885 = dma.vmem_to_hbm [thread:$0]  %s880, 1024, %s6, [#allocation4], 64, 64, 4
    $region45: #{tpu_custom_call.1} parent=1 // pred_fallthru
      _
    // Predicated region
    $region46: #{tpu_custom_call.1} parent=1 // pred_check
      _
    $region47: #{tpu_custom_call.1} parent=1 // pred_check_branch
      %887 = sbr.rel (0) target = $region49
    $region48: #{tpu_custom_call.1} parent=1 // pred_region
      %888 = dma.done [#allocation4], 1024
    $region49: #{tpu_custom_call.1} parent=1 // pred_fallthru
      _
    %889 = vsyncpa [#allocation3], 1
    %890 = vsyncpa [#allocation6], 1
    %891 = vsyncpa [#allocation9], 1
    %892 = vsyncpa [#allocation4], 1

</llo_original>
